<compile_context>
chip_gen: v7x
topology: tpu7x:2x2x1
jax: 0.10.0
libtpu: 0.0.40
codegen_flags: <defaults>
</compile_context>

<pallas_src>
import math

import jax
import jax.numpy as jnp
from jax.experimental import pallas as pl
from jax.experimental.pallas import tpu as pltpu


def gcn_kernel(sig_p_ref, adj_ref, x_ref, w1_ref, b1_ref, w2_ref, b2_ref, out_ref):
    f32 = jnp.float32
    bf16 = jnp.bfloat16
    g, n, _ = adj_ref.shape
    hp = w1_ref.shape[1]
    dp = w2_ref.shape[1]

    # A' = sigmoid(P_hat_symm) * adj  (sigmoid precomputed in the wrapper;
    # '+ I' is folded algebraically below and never materialized).
    a_prime = sig_p_ref[...] * adj_ref[...]                            # (G,N,N) f32

    # Degrees of A_tilde = A' + I.  Row and column reductions (XLU) avoid any
    # in-kernel transpose of the (N,1) vector; identical for symmetric adj.
    deg_r = jnp.sum(a_prime, axis=2, keepdims=True) + 1.0              # (G,N,1)
    deg_c = jnp.sum(a_prime, axis=1, keepdims=True) + 1.0              # (G,1,N)
    dinv_r = jnp.where(deg_r > 0.0, jax.lax.rsqrt(deg_r), 0.0)         # D^{-1/2}
    dinv_c = jnp.where(deg_c > 0.0, jax.lax.rsqrt(deg_c), 0.0)
    dd = dinv_r * dinv_r                                               # D^{-1}

    # Fold D^{-1/2} into the propagation operand once per graph:
    #   norm_adj @ S = (d * A' * d^T) @ S + D^{-1} * S
    a_hat = ((dinv_r * a_prime) * dinv_c).astype(bf16)                 # (G,N,N) bf16

    # gc1: shared-weight matmul over the stacked G*N rows (fills MXU rows).
    xs = x_ref[...].reshape(g * n, -1).astype(bf16)                    # (G*N, F)
    support1 = jnp.dot(xs, w1_ref[...],
                       preferred_element_type=f32).reshape(g, n, hp)   # (G,N,Hp) f32
    prop1 = jnp.einsum('gij,gjk->gik', a_hat, support1.astype(bf16),
                       preferred_element_type=f32)
    h = jnp.maximum(prop1 + dd * support1 + b1_ref[...], 0.0)          # relu

    # TODO(synk): F.dropout(x, p, training) treated as identity (inference mode);
    # training-mode parity would need pltpu.prng_seed / pltpu.prng_random_bits.

    # gc2: same structure, stacked shared-weight matmul then per-graph propagation.
    hs = h.reshape(g * n, hp).astype(bf16)
    support2 = jnp.dot(hs, w2_ref[...],
                       preferred_element_type=f32).reshape(g, n, dp)   # (G,N,Dp) f32
    prop2 = jnp.einsum('gij,gjk->gik', a_hat, support2.astype(bf16),
                       preferred_element_type=f32)
    out_ref[...] = prop2 + dd * support2 + b2_ref[...]


def create_symm_matrix_from_vec(p_vec, n):
    """Glue (plain JAX): lower-triangular fill (row-major, like torch.tril_indices)
    then symmetrize — matches create_symm_matrix_from_vec in the PyTorch code."""
    ti, tj = jnp.tril_indices(n)
    mat = jnp.zeros((n, n), jnp.float32).at[ti, tj].set(p_vec)
    return jnp.tril(mat) + jnp.tril(mat, -1).T


def _round_up(v, m):
    return ((v + m - 1) // m) * m


def _pick_graphs_per_step(batch, n, row_target=256, min_steps=2):
    """Largest divisor G of batch with G*n <= row_target (MXU row fill), preferring
    at least `min_steps` grid steps so both v7x TensorCores get work."""
    divisors = [g for g in range(1, batch + 1) if batch % g == 0]
    cands = [g for g in divisors if g * n <= row_target and batch // g >= min_steps]
    if not cands:
        cands = [g for g in divisors if g * n <= row_target] or [1]
    return max(cands)


def prepare_gcn_params(p_vec, w1, b1, w2, b2, num_nodes):
    """One-time preprocessing hoisted out of the per-call path: symmetrize +
    sigmoid P_vec (batch-invariant), pad weights/biases to lane-dense (128)
    widths, pre-cast the weight matrices to bf16 (zero padding stays exact)."""
    f32 = jnp.float32
    bf16 = jnp.bfloat16
    LANE = 128
    nfeat, nhid = w1.shape
    dims = w2.shape[1]
    hp = _round_up(nhid, LANE)
    dp = _round_up(dims, LANE)

    sig_p = jax.nn.sigmoid(create_symm_matrix_from_vec(p_vec, num_nodes)).astype(f32)
    w1p = jnp.zeros((nfeat, hp), f32).at[:, :nhid].set(w1.astype(f32)).astype(bf16)
    b1p = jnp.zeros((1, hp), f32).at[0, :nhid].set(b1.astype(f32))
    w2p = jnp.zeros((hp, dp), f32).at[:nhid, :dims].set(w2.astype(f32)).astype(bf16)
    b2p = jnp.zeros((1, dp), f32).at[0, :dims].set(b2.astype(f32))
    return sig_p, w1p, b1p, w2p, b2p, dims


def gcn_forward(p_vec, adj, x, w1, b1, w2, b2):
    """Batched GCN forward. adj: [B,N,N], x: [B,N,F]; P_vec & weights shared."""
    f32 = jnp.float32
    B, N, _ = adj.shape
    nfeat = x.shape[-1]

    sig_p, w1p, b1p, w2p, b2p, dims = prepare_gcn_params(p_vec, w1, b1, w2, b2, N)
    hp = w1p.shape[1]
    dp = w2p.shape[1]

    G = _pick_graphs_per_step(B, N)
    steps = B // G

    flops_per_graph = (2 * N * nfeat * hp + 2 * N * N * hp
                       + 2 * N * hp * dp + 2 * N * N * dp + 8 * N * N)
    cost = pl.CostEstimate(
        flops=int(B * flops_per_graph),
        transcendentals=int(B * 2 * N),  # rsqrt row/col per graph (sigmoid hoisted)
        bytes_accessed=int(4 * (sig_p.size + adj.size + x.size + b1p.size + b2p.size
                                + B * N * dp) + 2 * (w1p.size + w2p.size)),
    )

    out_padded = pl.pallas_call(
        gcn_kernel,
        out_shape=jax.ShapeDtypeStruct((B, N, dp), f32),
        grid=(steps,),
        in_specs=[
            pl.BlockSpec((N, N), lambda b: (0, 0)),              # sigmoid(P_hat_symm)
            pl.BlockSpec((G, N, N), lambda b: (b, 0, 0)),        # adj (G graphs/step)
            pl.BlockSpec((G, N, nfeat), lambda b: (b, 0, 0)),    # x   (G graphs/step)
            pl.BlockSpec((nfeat, hp), lambda b: (0, 0)),         # W1 (bf16, shared)
            pl.BlockSpec((1, hp), lambda b: (0, 0)),             # b1
            pl.BlockSpec((hp, dp), lambda b: (0, 0)),            # W2 (bf16, shared)
            pl.BlockSpec((1, dp), lambda b: (0, 0)),             # b2
        ],
        out_specs=pl.BlockSpec((G, N, dp), lambda b: (b, 0, 0)),
        compiler_params=pltpu.CompilerParams(
            dimension_semantics=("parallel",)),
        cost_estimate=cost,
    )(sig_p, adj, x, w1p, b1p, w2p, b2p)

    return out_padded[:, :, :dims]


def gcn_reference(p_vec, adj, x, w1, b1, w2, b2):
    """Pure-JAX reference mirroring the PyTorch forward (inference mode)."""
    n = adj.shape[-1]
    p_symm = create_symm_matrix_from_vec(p_vec, n)

    def single(a, xg):
        a_tilde = jax.nn.sigmoid(p_symm) * a + jnp.eye(n, dtype=jnp.float32)
        deg = a_tilde.sum(axis=0)
        d_inv_sqrt = jnp.where(deg > 0.0, deg ** -0.5, 0.0)
        d_exp = jnp.eye(n, dtype=jnp.float32) * d_inv_sqrt
        norm_adj = d_exp @ a_tilde @ d_exp
        h = jnp.maximum(norm_adj @ (xg @ w1) + b1, 0.0)
        return norm_adj @ (h @ w2) + b2

    return jax.vmap(single)(adj, x)


if __name__ == "__main__":
    # Small shapes implied by the module; B=16 graphs so a G=8 group gives
    # G*N = 256 MXU rows per step and 2 "parallel" grid steps (both v7x TCs).
    batch, num_nodes, nfeat, nhid, dims = 16, 32, 64, 32, 16

    key = jax.random.PRNGKey(0)
    k = jax.random.split(key, 6)

    # reset_parameters(): P_vec = ones of size n*(n+1)/2
    p_vec_size = (num_nodes * num_nodes - num_nodes) // 2 + num_nodes
    p_vec = jnp.ones((p_vec_size,), jnp.float32)

    # GraphConvolution.reset_parameters(): uniform(-1/sqrt(out_features), +...)
    stdv1 = 1.0 / math.sqrt(nhid)
    stdv2 = 1.0 / math.sqrt(dims)
    w1 = jax.random.uniform(k[0], (nfeat, nhid), jnp.float32, -stdv1, stdv1)
    b1 = jax.random.uniform(k[1], (nhid,), jnp.float32, -stdv1, stdv1)
    w2 = jax.random.uniform(k[2], (nhid, dims), jnp.float32, -stdv2, stdv2)
    b2 = jax.random.uniform(k[3], (dims,), jnp.float32, -stdv2, stdv2)

    # Deterministic inputs: node features + symmetric 0/1 adjacency per graph.
    x = jax.random.normal(k[4], (batch, num_nodes, nfeat), jnp.float32)
    a_rand = (jax.random.uniform(k[5], (batch, num_nodes, num_nodes)) < 0.2).astype(jnp.float32)
    adj = jnp.maximum(a_rand, jnp.swapaxes(a_rand, -1, -2))

    out = gcn_forward(p_vec, adj, x, w1, b1, w2, b2)
    out = jax.block_until_ready(out)

    ref = gcn_reference(p_vec, adj, x, w1, b1, w2, b2)
    assert out.shape == (batch, num_nodes, dims)
    assert bool(jnp.allclose(out, ref, rtol=2e-2, atol=2e-2)), "mismatch vs JAX reference"

    print("KERNEL_OK")
</pallas_src>

<mosaic_0001>
module attributes {stable_mosaic.version = 11 : i64} {
  func.func @gcn_kernel(%arg0: i32, %arg1: memref<32x32xf32, #tpu.memory_space<vmem>>, %arg2: memref<8x32x32xf32, #tpu.memory_space<vmem>>, %arg3: memref<8x32x64xf32, #tpu.memory_space<vmem>>, %arg4: memref<64x128xbf16, #tpu.memory_space<vmem>>, %arg5: memref<1x128xf32, #tpu.memory_space<vmem>>, %arg6: memref<128x128xbf16, #tpu.memory_space<vmem>>, %arg7: memref<1x128xf32, #tpu.memory_space<vmem>>, %arg8: memref<8x32x128xf32, #tpu.memory_space<vmem>>) attributes {dimension_semantics = [#tpu.dimension_semantics<parallel>], iteration_bounds = array<i64: 2>, scalar_prefetch = 0 : i64, scratch_operands = 0 : i64, tpu.core_type = #tpu.core_type<tc>, window_params = [{pipeline_mode = #tpu.pipeline_mode<synchronous>, transform_indices = @transform_0, window_bounds = array<i64: 32, 32>}, {transform_indices = @transform_1, window_bounds = array<i64: 8, 32, 32>}, {transform_indices = @transform_2, window_bounds = array<i64: 8, 32, 64>}, {pipeline_mode = #tpu.pipeline_mode<synchronous>, transform_indices = @transform_3, window_bounds = array<i64: 64, 128>}, {pipeline_mode = #tpu.pipeline_mode<synchronous>, transform_indices = @transform_4, window_bounds = array<i64: 1, 128>}, {pipeline_mode = #tpu.pipeline_mode<synchronous>, transform_indices = @transform_5, window_bounds = array<i64: 128, 128>}, {pipeline_mode = #tpu.pipeline_mode<synchronous>, transform_indices = @transform_6, window_bounds = array<i64: 1, 128>}, {transform_indices = @transform_7, window_bounds = array<i64: 8, 32, 128>}]} {
    %c0 = arith.constant 0 : index
    %c0_0 = arith.constant 0 : index
    %0 = vector.load %arg1[%c0, %c0_0] : memref<32x32xf32, #tpu.memory_space<vmem>>, vector<32x32xf32>
    %c0_1 = arith.constant 0 : index
    %c0_2 = arith.constant 0 : index
    %c0_3 = arith.constant 0 : index
    %1 = vector.load %arg2[%c0_1, %c0_2, %c0_3] : memref<8x32x32xf32, #tpu.memory_space<vmem>>, vector<8x32x32xf32>
    %2 = vector.shape_cast %0 : vector<32x32xf32> to vector<1x32x32xf32>
    %3 = vector.broadcast %2 : vector<1x32x32xf32> to vector<8x32x32xf32>
    %4 = arith.mulf %3, %1 : vector<8x32x32xf32>
    %cst = arith.constant dense<0.000000e+00> : vector<8x32xf32>
    %5 = vector.multi_reduction <add>, %4, %cst [2] : vector<8x32x32xf32> to vector<8x32xf32>
    %6 = vector.shape_cast %5 : vector<8x32xf32> to vector<8x32x1xf32>
    %cst_4 = arith.constant 1.000000e+00 : f32
    %7 = vector.broadcast %cst_4 : f32 to vector<8x32x1xf32>
    %8 = arith.addf %6, %7 : vector<8x32x1xf32>
    %cst_5 = arith.constant dense<0.000000e+00> : vector<8x32xf32>
    %9 = vector.multi_reduction <add>, %4, %cst_5 [1] : vector<8x32x32xf32> to vector<8x32xf32>
    %10 = vector.shape_cast %9 : vector<8x32xf32> to vector<8x1x32xf32>
    %cst_6 = arith.constant 1.000000e+00 : f32
    %11 = vector.broadcast %cst_6 : f32 to vector<8x1x32xf32>
    %12 = arith.addf %10, %11 : vector<8x1x32xf32>
    %cst_7 = arith.constant 0.000000e+00 : f32
    %13 = vector.broadcast %cst_7 : f32 to vector<8x32x1xf32>
    %14 = arith.cmpf ogt, %8, %13 : vector<8x32x1xf32>
    %15 = math.rsqrt %8 : vector<8x32x1xf32>
    %cst_8 = arith.constant 0.000000e+00 : f32
    %16 = vector.broadcast %cst_8 : f32 to vector<8x32x1xf32>
    %17 = arith.select %14, %15, %16 : vector<8x32x1xi1>, vector<8x32x1xf32>
    %cst_9 = arith.constant 0.000000e+00 : f32
    %18 = vector.broadcast %cst_9 : f32 to vector<8x1x32xf32>
    %19 = arith.cmpf ogt, %12, %18 : vector<8x1x32xf32>
    %20 = math.rsqrt %12 : vector<8x1x32xf32>
    %cst_10 = arith.constant 0.000000e+00 : f32
    %21 = vector.broadcast %cst_10 : f32 to vector<8x1x32xf32>
    %22 = arith.select %19, %20, %21 : vector<8x1x32xi1>, vector<8x1x32xf32>
    %23 = arith.mulf %17, %17 : vector<8x32x1xf32>
    %24 = vector.broadcast %17 : vector<8x32x1xf32> to vector<8x32x32xf32>
    %25 = arith.mulf %24, %4 : vector<8x32x32xf32>
    %26 = vector.broadcast %22 : vector<8x1x32xf32> to vector<8x32x32xf32>
    %27 = arith.mulf %25, %26 : vector<8x32x32xf32>
    %28 = arith.truncf %27 : vector<8x32x32xf32> to vector<8x32x32xbf16>
    %c0_11 = arith.constant 0 : index
    %c0_12 = arith.constant 0 : index
    %c0_13 = arith.constant 0 : index
    %29 = vector.load %arg3[%c0_11, %c0_12, %c0_13] : memref<8x32x64xf32, #tpu.memory_space<vmem>>, vector<8x32x64xf32>
    %30 = vector.shape_cast %29 : vector<8x32x64xf32> to vector<256x64xf32>
    %31 = arith.truncf %30 : vector<256x64xf32> to vector<256x64xbf16>
    %c0_14 = arith.constant 0 : index
    %c0_15 = arith.constant 0 : index
    %32 = vector.load %arg4[%c0_14, %c0_15] : memref<64x128xbf16, #tpu.memory_space<vmem>>, vector<64x128xbf16>
    %cst_16 = arith.constant dense<0.000000e+00> : vector<256x128xf32>
    %33 = tpu.matmul %31, %32, %cst_16 {dimension_numbers = #tpu.dot_dimension_numbers<[1], [0], [0], [1], [0, 0, 1, 1], [], []>} : vector<256x64xbf16>, vector<64x128xbf16>, vector<256x128xf32> -> vector<256x128xf32>
    %34 = vector.shape_cast %33 : vector<256x128xf32> to vector<8x32x128xf32>
    %35 = arith.truncf %34 : vector<8x32x128xf32> to vector<8x32x128xbf16>
    "tpu.trace_start"() <{level = 10 : i32, message = "gij,gjk->gik"}> : () -> ()
    %cst_17 = arith.constant dense<0.000000e+00> : vector<8x32x128xf32>
    %36 = tpu.matmul %28, %35, %cst_17 {dimension_numbers = #tpu.dot_dimension_numbers<[2], [1], [1], [2], [0, 0, 0, 1, 1, 2], [0], [0]>} : vector<8x32x32xbf16>, vector<8x32x128xbf16>, vector<8x32x128xf32> -> vector<8x32x128xf32>
    "tpu.trace_stop"() : () -> ()
    %37 = vector.broadcast %23 : vector<8x32x1xf32> to vector<8x32x128xf32>
    %38 = arith.mulf %37, %34 : vector<8x32x128xf32>
    %39 = arith.addf %36, %38 : vector<8x32x128xf32>
    %c0_18 = arith.constant 0 : index
    %c0_19 = arith.constant 0 : index
    %40 = vector.load %arg5[%c0_18, %c0_19] : memref<1x128xf32, #tpu.memory_space<vmem>>, vector<1x128xf32>
    %41 = vector.shape_cast %40 : vector<1x128xf32> to vector<1x1x128xf32>
    %42 = vector.broadcast %41 : vector<1x1x128xf32> to vector<8x32x128xf32>
    %43 = arith.addf %39, %42 : vector<8x32x128xf32>
    %cst_20 = arith.constant 0.000000e+00 : f32
    %44 = vector.broadcast %cst_20 : f32 to vector<8x32x128xf32>
    %45 = arith.maximumf %43, %44 : vector<8x32x128xf32>
    %46 = vector.shape_cast %45 : vector<8x32x128xf32> to vector<256x128xf32>
    %47 = arith.truncf %46 : vector<256x128xf32> to vector<256x128xbf16>
    %c0_21 = arith.constant 0 : index
    %c0_22 = arith.constant 0 : index
    %48 = vector.load %arg6[%c0_21, %c0_22] : memref<128x128xbf16, #tpu.memory_space<vmem>>, vector<128x128xbf16>
    %cst_23 = arith.constant dense<0.000000e+00> : vector<256x128xf32>
    %49 = tpu.matmul %47, %48, %cst_23 {dimension_numbers = #tpu.dot_dimension_numbers<[1], [0], [0], [1], [0, 0, 1, 1], [], []>} : vector<256x128xbf16>, vector<128x128xbf16>, vector<256x128xf32> -> vector<256x128xf32>
    %50 = vector.shape_cast %49 : vector<256x128xf32> to vector<8x32x128xf32>
    %51 = arith.truncf %50 : vector<8x32x128xf32> to vector<8x32x128xbf16>
    "tpu.trace_start"() <{level = 10 : i32, message = "gij,gjk->gik"}> : () -> ()
    %cst_24 = arith.constant dense<0.000000e+00> : vector<8x32x128xf32>
    %52 = tpu.matmul %28, %51, %cst_24 {dimension_numbers = #tpu.dot_dimension_numbers<[2], [1], [1], [2], [0, 0, 0, 1, 1, 2], [0], [0]>} : vector<8x32x32xbf16>, vector<8x32x128xbf16>, vector<8x32x128xf32> -> vector<8x32x128xf32>
    "tpu.trace_stop"() : () -> ()
    %53 = vector.broadcast %23 : vector<8x32x1xf32> to vector<8x32x128xf32>
    %54 = arith.mulf %53, %50 : vector<8x32x128xf32>
    %55 = arith.addf %52, %54 : vector<8x32x128xf32>
    %c0_25 = arith.constant 0 : index
    %c0_26 = arith.constant 0 : index
    %56 = vector.load %arg7[%c0_25, %c0_26] : memref<1x128xf32, #tpu.memory_space<vmem>>, vector<1x128xf32>
    %57 = vector.shape_cast %56 : vector<1x128xf32> to vector<1x1x128xf32>
    %58 = vector.broadcast %57 : vector<1x1x128xf32> to vector<8x32x128xf32>
    %59 = arith.addf %55, %58 : vector<8x32x128xf32>
    %c0_27 = arith.constant 0 : index
    %c0_28 = arith.constant 0 : index
    %c0_29 = arith.constant 0 : index
    %60 = vector.load %arg8[%c0_27, %c0_28, %c0_29] : memref<8x32x128xf32, #tpu.memory_space<vmem>>, vector<8x32x128xf32>
    tpu.vector_store %arg8[%c0_27, %c0_28, %c0_29], %59 {strides = array<i32>} : memref<8x32x128xf32, #tpu.memory_space<vmem>>, vector<8x32x128xf32>,
    return
  }
  func.func @transform_0(%arg0: i32) -> (i32, i32) {
    %c0_i32 = arith.constant 0 : i32
    %c0_i32_0 = arith.constant 0 : i32
    %c0_i32_1 = arith.constant 0 : i32
    return %c0_i32, %c0_i32_0 : i32, i32
  }
  func.func @transform_1(%arg0: i32) -> (i32, i32, i32) {
    %c0_i32 = arith.constant 0 : i32
    %c0_i32_0 = arith.constant 0 : i32
    %c0_i32_1 = arith.constant 0 : i32
    return %arg0, %c0_i32, %c0_i32_0 : i32, i32, i32
  }
  func.func @transform_2(%arg0: i32) -> (i32, i32, i32) {
    %c0_i32 = arith.constant 0 : i32
    %c0_i32_0 = arith.constant 0 : i32
    %c0_i32_1 = arith.constant 0 : i32
    return %arg0, %c0_i32, %c0_i32_0 : i32, i32, i32
  }
  func.func @transform_3(%arg0: i32) -> (i32, i32) {
    %c0_i32 = arith.constant 0 : i32
    %c0_i32_0 = arith.constant 0 : i32
    %c0_i32_1 = arith.constant 0 : i32
    return %c0_i32, %c0_i32_0 : i32, i32
  }
  func.func @transform_4(%arg0: i32) -> (i32, i32) {
    %c0_i32 = arith.constant 0 : i32
    %c0_i32_0 = arith.constant 0 : i32
    %c0_i32_1 = arith.constant 0 : i32
    return %c0_i32, %c0_i32_0 : i32, i32
  }
  func.func @transform_5(%arg0: i32) -> (i32, i32) {
    %c0_i32 = arith.constant 0 : i32
    %c0_i32_0 = arith.constant 0 : i32
    %c0_i32_1 = arith.constant 0 : i32
    return %c0_i32, %c0_i32_0 : i32, i32
  }
  func.func @transform_6(%arg0: i32) -> (i32, i32) {
    %c0_i32 = arith.constant 0 : i32
    %c0_i32_0 = arith.constant 0 : i32
    %c0_i32_1 = arith.constant 0 : i32
    return %c0_i32, %c0_i32_0 : i32, i32
  }
  func.func @transform_7(%arg0: i32) -> (i32, i32, i32) {
    %c0_i32 = arith.constant 0 : i32
    %c0_i32_0 = arith.constant 0 : i32
    %c0_i32_1 = arith.constant 0 : i32
    return %arg0, %c0_i32, %c0_i32_0 : i32, i32, i32
  }
}

</mosaic_0001>

<llo_original>
// kernel: tpu_custom_call.1
$region0: #{tpu_custom_call.1}
  #allocation0 [shape = 'u32[]', space=smem, size = 0x4, offset = 0x4, fixed_abs, tag = 'smem constant byte address 0x4 - core index']
  #allocation1 [shape = 'u32[144,128]{1,0:T(1,128)}', space=vmem, size = 0x12000, scoped, tag = 'internal scratch']
  %s0 = inlined_call_operand.hbm [shape: f32[32,32], index: 0, kind: input, shape index: {}]
  %s1 = inlined_call_operand.hbm [shape: f32[16,32,32], index: 1, kind: input, shape index: {}]
  %s2 = inlined_call_operand.hbm [shape: f32[16,32,64], index: 2, kind: input, shape index: {}]
  %s3 = inlined_call_operand.hbm [shape: bf16[64,128], index: 3, kind: input, shape index: {}]
  %s4 = inlined_call_operand.vmem [shape: f32[1,128], index: 4, kind: input, shape index: {}]
  %s5 = inlined_call_operand.hbm [shape: bf16[128,128], index: 5, kind: input, shape index: {}]
  %s6 = inlined_call_operand.vmem [shape: f32[1,128], index: 6, kind: input, shape index: {}]
  %s7 = inlined_call_operand.hbm [shape: f32[16,32,128], index: 7, kind: output, shape index: {}]
  %s8 = sld [smem:[#allocation0]]
  $region81: #{tpu_custom_call.1} parent=0
    _
  %s10 = ssub.s32 1, %s8
  %s11 = scalar_select 0, %s10, %s8
  $region1: #{tpu_custom_call.1} parent=0
    #allocation2 [shape = 'u8[16384]{0}', space=vmem, size = 0x4000, scoped, tag = 'input window, operand 0, single buffered']
    #allocation3 [shape = 's32[2]{0}', space=sflag, size = 0x8, scoped, tag = 'scoped memory for tpu_custom_call.1']
    #allocation4 [shape = 's32[2]{0}', space=sflag, size = 0x8, scoped, tag = 'scoped memory for tpu_custom_call.1']
    #allocation5 [shape = 'u8[262144]{0}', space=vmem, size = 0x40000, scoped, tag = 'input window, operand 1']
    #allocation6 [shape = 's32[2]{0}', space=sflag, size = 0x8, scoped, tag = 'scoped memory for tpu_custom_call.1']
    #allocation7 [shape = 'u8[262144]{0}', space=vmem, size = 0x40000, scoped, tag = 'input window, operand 2']
    #allocation8 [shape = 'u8[16384]{0}', space=vmem, size = 0x4000, scoped, tag = 'input window, operand 3, single buffered']
    #allocation9 [shape = 's32[1]{0}', space=sflag, size = 0x4, scoped, tag = 'scoped memory for tpu_custom_call.1']
    #allocation10 [shape = 'u8[32768]{0}', space=vmem, size = 0x8000, scoped, tag = 'input window, operand 5, single buffered']
    #allocation11 [shape = 'u8[262144]{0}', space=vmem, size = 0x40000, scoped, tag = 'output window, operand 0']
    %12 = vsyncpa [#allocation3], 0
    %13 = vsyncpa [#allocation6], 0
    %s14 = scalar_lea.sflag [#allocation6], 1
    %15 = vsyncpa %s14, 0
    %16 = vsyncpa [#allocation9], 0
    %17 = vsyncpa [#allocation4], 0
    %s18 = scalar_lea.sflag [#allocation4], 1
    %19 = vsyncpa %s18, 0
    loop: start=0, step=1, limit=4
    $region2: #{tpu_custom_call.1} parent=1 // loop_pre_header
      _
    $region3: #{tpu_custom_call.1} parent=1 // loop_header
      %s21 = sphi 0, %s25
      %p22 = scmp.ge.s32.totalorder %s21, 4
      %s29 = sphi 0, %s29
      %s31 = sphi 0, %s29
      %s32 = sphi 0, %s31
      %s46 = sphi 0, %s32
      %s52 = sphi 0, %s54
      %s55 = sphi 0, %s52
      %s56 = sphi 0, %s55
      %s72 = sphi 0, %s56
      %s78 = sphi 0, %s80
      %s81 = sphi 0, %s78
      %s82 = sphi 0, %s81
      %s98 = sphi 0, %s82
      %s102 = sphi 0, %s102
      %s104 = sphi 0, %s102
      %s105 = sphi 0, %s104
      %s119 = sphi 0, %s105
      %s123 = sphi 0, %s123
      %s125 = sphi 0, %s123
      %s126 = sphi 0, %s125
      %s140 = sphi 0, %s126
      %s144 = sphi 0, %s144
      %s146 = sphi 0, %s144
      %s147 = sphi 0, %s146
      %s161 = sphi 0, %s147
      %s165 = sphi 0, %s165
      %s167 = sphi 0, %s165
      %s168 = sphi 0, %s167
      %s182 = sphi 0, %s168
      %s188 = sphi 0, %s190
      %s191 = sphi 0, %s188
      %s192 = sphi 0, %s191
      %s208 = sphi 0, %s192
    $region4: #{tpu_custom_call.1} parent=1 // loop_header_branch
      %24 = sbr.rel (%p22) target = $region8
    $region5: #{tpu_custom_call.1} parent=1 // loop_body
      %s26 = ssub.s32 %s21, 1
      %s27 = ssub.s32 %s21, 2
      %s28 = sadd.s32 %s21, 1
      %s30 = sadd.s32 %s29, 1
      %p33 = scmp.eq.s32.totalorder %s21, 1
      %p34 = scmp.ne.s32.totalorder %s29, %s31
      %p35 = scmp.eq.s32.totalorder %s21, 0
      %p36 = por %p34, %p35
      %p37 = scmp.ne.s32.totalorder %s29, %s31
      %p38 = scmp.eq.s32.totalorder %s26, 1
      %p39 = por %p37, %p38
      %p40 = scmp.ne.s32.totalorder %s31, %s32
      %p41 = scmp.eq.s32.totalorder %s26, 0
      %p42 = por %p40, %p41
      %p43 = scmp.ne.s32.totalorder %s31, %s32
      %p44 = scmp.eq.s32.totalorder %s27, 1
      %p45 = por %p43, %p44
      %p47 = scmp.ne.s32.totalorder %s32, %s46
      %p48 = scmp.eq.s32.totalorder %s27, 0
      %p49 = por %p47, %p48
      %s50 = ssub.s32 %s21, %s28
      %p51 = scmp.eq.s32.totalorder %s50, 0
      %s53 = sadd.s32 %s52, 1
      %s54 = scalar_select %p51, %s52, %s53
      %p57 = pneg %p51
      %p58 = scmp.eq.s32.totalorder %s21, 1
      %p59 = por %p57, %p58
      %p60 = scmp.ne.s32.totalorder %s52, %s55
      %p61 = scmp.eq.s32.totalorder %s21, 0
      %p62 = por %p60, %p61
      %p63 = scmp.ne.s32.totalorder %s52, %s55
      %p64 = scmp.eq.s32.totalorder %s26, 1
      %p65 = por %p63, %p64
      %p66 = scmp.ne.s32.totalorder %s55, %s56
      %p67 = scmp.eq.s32.totalorder %s26, 0
      %p68 = por %p66, %p67
      %p69 = scmp.ne.s32.totalorder %s55, %s56
      %p70 = scmp.eq.s32.totalorder %s27, 1
      %p71 = por %p69, %p70
      %p73 = scmp.ne.s32.totalorder %s56, %s72
      %p74 = scmp.eq.s32.totalorder %s27, 0
      %p75 = por %p73, %p74
      %s76 = ssub.s32 %s21, %s28
      %p77 = scmp.eq.s32.totalorder %s76, 0
      %s79 = sadd.s32 %s78, 1
      %s80 = scalar_select %p77, %s78, %s79
      %p83 = pneg %p77
      %p84 = scmp.eq.s32.totalorder %s21, 1
      %p85 = por %p83, %p84
      %p86 = scmp.ne.s32.totalorder %s78, %s81
      %p87 = scmp.eq.s32.totalorder %s21, 0
      %p88 = por %p86, %p87
      %p89 = scmp.ne.s32.totalorder %s78, %s81
      %p90 = scmp.eq.s32.totalorder %s26, 1
      %p91 = por %p89, %p90
      %p92 = scmp.ne.s32.totalorder %s81, %s82
      %p93 = scmp.eq.s32.totalorder %s26, 0
      %p94 = por %p92, %p93
      %p95 = scmp.ne.s32.totalorder %s81, %s82
      %p96 = scmp.eq.s32.totalorder %s27, 1
      %p97 = por %p95, %p96
      %p99 = scmp.ne.s32.totalorder %s82, %s98
      %p100 = scmp.eq.s32.totalorder %s27, 0
      %p101 = por %p99, %p100
      %s103 = sadd.s32 %s102, 1
      %p106 = scmp.eq.s32.totalorder %s21, 1
      %p107 = scmp.ne.s32.totalorder %s102, %s104
      %p108 = scmp.eq.s32.totalorder %s21, 0
      %p109 = por %p107, %p108
      %p110 = scmp.ne.s32.totalorder %s102, %s104
      %p111 = scmp.eq.s32.totalorder %s26, 1
      %p112 = por %p110, %p111
      %p113 = scmp.ne.s32.totalorder %s104, %s105
      %p114 = scmp.eq.s32.totalorder %s26, 0
      %p115 = por %p113, %p114
      %p116 = scmp.ne.s32.totalorder %s104, %s105
      %p117 = scmp.eq.s32.totalorder %s27, 1
      %p118 = por %p116, %p117
      %p120 = scmp.ne.s32.totalorder %s105, %s119
      %p121 = scmp.eq.s32.totalorder %s27, 0
      %p122 = por %p120, %p121
      %s124 = sadd.s32 %s123, 1
      %p127 = scmp.eq.s32.totalorder %s21, 1
      %p128 = scmp.ne.s32.totalorder %s123, %s125
      %p129 = scmp.eq.s32.totalorder %s21, 0
      %p130 = por %p128, %p129
      %p131 = scmp.ne.s32.totalorder %s123, %s125
      %p132 = scmp.eq.s32.totalorder %s26, 1
      %p133 = por %p131, %p132
      %p134 = scmp.ne.s32.totalorder %s125, %s126
      %p135 = scmp.eq.s32.totalorder %s26, 0
      %p136 = por %p134, %p135
      %p137 = scmp.ne.s32.totalorder %s125, %s126
      %p138 = scmp.eq.s32.totalorder %s27, 1
      %p139 = por %p137, %p138
      %p141 = scmp.ne.s32.totalorder %s126, %s140
      %p142 = scmp.eq.s32.totalorder %s27, 0
      %p143 = por %p141, %p142
      %s145 = sadd.s32 %s144, 1
      %p148 = scmp.eq.s32.totalorder %s21, 1
      %p149 = scmp.ne.s32.totalorder %s144, %s146
      %p150 = scmp.eq.s32.totalorder %s21, 0
      %p151 = por %p149, %p150
      %p152 = scmp.ne.s32.totalorder %s144, %s146
      %p153 = scmp.eq.s32.totalorder %s26, 1
      %p154 = por %p152, %p153
      %p155 = scmp.ne.s32.totalorder %s146, %s147
      %p156 = scmp.eq.s32.totalorder %s26, 0
      %p157 = por %p155, %p156
      %p158 = scmp.ne.s32.totalorder %s146, %s147
      %p159 = scmp.eq.s32.totalorder %s27, 1
      %p160 = por %p158, %p159
      %p162 = scmp.ne.s32.totalorder %s147, %s161
      %p163 = scmp.eq.s32.totalorder %s27, 0
      %p164 = por %p162, %p163
      %s166 = sadd.s32 %s165, 1
      %p169 = scmp.eq.s32.totalorder %s21, 1
      %p170 = scmp.ne.s32.totalorder %s165, %s167
      %p171 = scmp.eq.s32.totalorder %s21, 0
      %p172 = por %p170, %p171
      %p173 = scmp.ne.s32.totalorder %s165, %s167
      %p174 = scmp.eq.s32.totalorder %s26, 1
      %p175 = por %p173, %p174
      %p176 = scmp.ne.s32.totalorder %s167, %s168
      %p177 = scmp.eq.s32.totalorder %s26, 0
      %p178 = por %p176, %p177
      %p179 = scmp.ne.s32.totalorder %s167, %s168
      %p180 = scmp.eq.s32.totalorder %s27, 1
      %p181 = por %p179, %p180
      %p183 = scmp.ne.s32.totalorder %s168, %s182
      %p184 = scmp.eq.s32.totalorder %s27, 0
      %p185 = por %p183, %p184
      %s186 = ssub.s32 %s21, %s28
      %p187 = scmp.eq.s32.totalorder %s186, 0
      %s189 = sadd.s32 %s188, 1
      %s190 = scalar_select %p187, %s188, %s189
      %p193 = pneg %p187
      %p194 = scmp.eq.s32.totalorder %s21, 1
      %p195 = por %p193, %p194
      %p196 = scmp.ne.s32.totalorder %s188, %s191
      %p197 = scmp.eq.s32.totalorder %s21, 0
      %p198 = por %p196, %p197
      %p199 = scmp.ne.s32.totalorder %s188, %s191
      %p200 = scmp.eq.s32.totalorder %s26, 1
      %p201 = por %p199, %p200
      %p202 = scmp.ne.s32.totalorder %s191, %s192
      %p203 = scmp.eq.s32.totalorder %s26, 0
      %p204 = por %p202, %p203
      %p205 = scmp.ne.s32.totalorder %s191, %s192
      %p206 = scmp.eq.s32.totalorder %s27, 1
      %p207 = por %p205, %p206
      %p209 = scmp.ne.s32.totalorder %s192, %s208
      %p210 = scmp.eq.s32.totalorder %s27, 0
      %p211 = por %p209, %p210
      %p212 = scmp.le.s32.totalorder 1, %s21
      %p213 = scmp.lt.s32.totalorder %s21, 3
      %p214 = pnand %p212, %p213
      %p215 = pneg %p214
      // Predicated region
      $region9: #{tpu_custom_call.1} parent=5 // pred_check
        _
      $region10: #{tpu_custom_call.1} parent=5 // pred_check_branch
        %217 = sbr.rel (%p214) target = $region12
      $region11: #{tpu_custom_call.1} parent=5 // pred_region
        %s218 = ssub.s32 %s21, 1
        // Predicated region
        $region13: #{tpu_custom_call.1} parent=11 // pred_check
          %p219 = pneg %p42
        $region14: #{tpu_custom_call.1} parent=11 // pred_check_branch
          %221 = sbr.rel (%p219) target = $region16
        $region15: #{tpu_custom_call.1} parent=11 // pred_region
          %s223 = ssub.s32 512, 512
          %224 = vsyncadd [#allocation3], %s223
          %s225 = sshll.u32 [#allocation2], 4
          %s226 = int_to_ptr.vmem [resolvable:$true] %s225
          %231 = dma.hbm_to_vmem [thread:$0]  %s0, 512, %s226, [#allocation3], 128, 128, 8
        $region16: #{tpu_custom_call.1} parent=11 // pred_fallthru
          _
        // Predicated region
        $region17: #{tpu_custom_call.1} parent=11 // pred_check
          %p232 = pneg %p115
        $region18: #{tpu_custom_call.1} parent=11 // pred_check_branch
          %234 = sbr.rel (%p232) target = $region20
        $region19: #{tpu_custom_call.1} parent=11 // pred_region
          %s236 = ssub.s32 512, 512
          %237 = vsyncadd [#allocation9], %s236
          %s238 = sshll.u32 [#allocation8], 4
          %s239 = int_to_ptr.vmem [resolvable:$true] %s238
          %244 = dma.hbm_to_vmem [thread:$0]  %s3, 512, %s239, [#allocation9], 64, 64, 4
        $region20: #{tpu_custom_call.1} parent=11 // pred_fallthru
          _
        // Predicated region
        $region21: #{tpu_custom_call.1} parent=11 // pred_check
          %p245 = pneg %p136
        $region22: #{tpu_custom_call.1} parent=11 // pred_check_branch
          %247 = sbr.rel (%p245) target = $region24
        $region23: #{tpu_custom_call.1} parent=11 // pred_region
          _
        $region24: #{tpu_custom_call.1} parent=11 // pred_fallthru
          _
        // Predicated region
        $region25: #{tpu_custom_call.1} parent=11 // pred_check
          %p248 = pneg %p157
        $region26: #{tpu_custom_call.1} parent=11 // pred_check_branch
          %250 = sbr.rel (%p248) target = $region28
        $region27: #{tpu_custom_call.1} parent=11 // pred_region
          %s252 = ssub.s32 1024, 1024
          %253 = vsyncadd [#allocation9], %s252
          %s254 = sshll.u32 [#allocation10], 4
          %s255 = int_to_ptr.vmem [resolvable:$true] %s254
          %260 = dma.hbm_to_vmem [thread:$0]  %s5, 1024, %s255, [#allocation9], 64, 64, 4
        $region28: #{tpu_custom_call.1} parent=11 // pred_fallthru
          _
        // Predicated region
        $region29: #{tpu_custom_call.1} parent=11 // pred_check
          %p261 = pneg %p178
        $region30: #{tpu_custom_call.1} parent=11 // pred_check_branch
          %263 = sbr.rel (%p261) target = $region32
        $region31: #{tpu_custom_call.1} parent=11 // pred_region
          _
        $region32: #{tpu_custom_call.1} parent=11 // pred_fallthru
          _
      $region12: #{tpu_custom_call.1} parent=5 // pred_fallthru
        _
      %p264 = scmp.lt.s32.totalorder %s21, 2
      // Predicated region
      $region33: #{tpu_custom_call.1} parent=5 // pred_check
        %p265 = pneg %p264
      $region34: #{tpu_custom_call.1} parent=5 // pred_check_branch
        %267 = sbr.rel (%p265) target = $region36
      $region35: #{tpu_custom_call.1} parent=5 // pred_region
        // Predicated region
        $region37: #{tpu_custom_call.1} parent=35 // pred_check
          %p268 = pneg %p62
        $region38: #{tpu_custom_call.1} parent=35 // pred_check_branch
          %270 = sbr.rel (%p268) target = $region40
        $region39: #{tpu_custom_call.1} parent=35 // pred_region
          %s271 = sand.u32 %s21, 1
          %s272 = scalar_lea.sflag [#allocation6], %s271
          %s273 = sand.u32 %s52, 1
          %s274 = smul.addr %s273, 256
          %s275 = scalar_lea.vmem [#allocation5], %s274
          %s276 = smul.u32 8, %s21
          %s278 = ssub.s32 4096, 4096
          %279 = vsyncadd %s272, %s278
          %s280 = smul.addr %s276, 4
          %s281 = smul.addr %s280, 128
          %s282 = scalar_lea.hbm %s1, %s281
          %s283 = sshll.u32 %s275, 4
          %s284 = int_to_ptr.vmem [resolvable:$true] %s283
          %289 = dma.hbm_to_vmem [thread:$0]  %s282, 4096, %s284, %s272, 128, 128, 8
        $region40: #{tpu_custom_call.1} parent=35 // pred_fallthru
          _
        // Predicated region
        $region41: #{tpu_custom_call.1} parent=35 // pred_check
          %p290 = pneg %p88
        $region42: #{tpu_custom_call.1} parent=35 // pred_check_branch
          %292 = sbr.rel (%p290) target = $region44
        $region43: #{tpu_custom_call.1} parent=35 // pred_region
          %s293 = sand.u32 %s21, 1
          %s294 = scalar_lea.sflag [#allocation6], %s293
          %s295 = sand.u32 %s78, 1
          %s296 = smul.addr %s295, 256
          %s297 = scalar_lea.vmem [#allocation7], %s296
          %s298 = smul.u32 8, %s21
          %s300 = ssub.s32 4096, 4096
          %301 = vsyncadd %s294, %s300
          %s302 = smul.addr %s298, 4
          %s303 = smul.addr %s302, 128
          %s304 = scalar_lea.hbm %s2, %s303
          %s305 = sshll.u32 %s297, 4
          %s306 = int_to_ptr.vmem [resolvable:$true] %s305
          %311 = dma.hbm_to_vmem [thread:$0]  %s304, 4096, %s306, %s294, 128, 128, 8
        $region44: #{tpu_custom_call.1} parent=35 // pred_fallthru
          _
      $region36: #{tpu_custom_call.1} parent=5 // pred_fallthru
        _
      %p312 = scmp.le.s32.totalorder 1, %s21
      %p313 = scmp.lt.s32.totalorder %s21, 3
      %p314 = pnand %p312, %p313
      %p315 = pneg %p314
      // Predicated region
      $region45: #{tpu_custom_call.1} parent=5 // pred_check
        _
      $region46: #{tpu_custom_call.1} parent=5 // pred_check_branch
        %317 = sbr.rel (%p314) target = $region48
      $region47: #{tpu_custom_call.1} parent=5 // pred_region
        %s318 = ssub.s32 %s21, 1
        // Predicated region
        $region49: #{tpu_custom_call.1} parent=47 // pred_check
          %p319 = pneg %p42
        $region50: #{tpu_custom_call.1} parent=47 // pred_check_branch
          %321 = sbr.rel (%p319) target = $region52
        $region51: #{tpu_custom_call.1} parent=47 // pred_region
          %322 = dma.done [#allocation3], 512
        $region52: #{tpu_custom_call.1} parent=47 // pred_fallthru
          _
        %s323 = sand.u32 %s26, 1
        %s324 = scalar_lea.sflag [#allocation6], %s323
        %s325 = sand.u32 %s55, 1
        %s326 = smul.addr %s325, 256
        %s327 = scalar_lea.vmem [#allocation5], %s326
        // Predicated region
        $region53: #{tpu_custom_call.1} parent=47 // pred_check
          %p328 = pneg %p68
        $region54: #{tpu_custom_call.1} parent=47 // pred_check_branch
          %330 = sbr.rel (%p328) target = $region56
        $region55: #{tpu_custom_call.1} parent=47 // pred_region
          %331 = dma.done %s324, 4096
        $region56: #{tpu_custom_call.1} parent=47 // pred_fallthru
          _
        %s332 = sand.u32 %s26, 1
        %s333 = scalar_lea.sflag [#allocation6], %s332
        %s334 = sand.u32 %s81, 1
        %s335 = smul.addr %s334, 256
        %s336 = scalar_lea.vmem [#allocation7], %s335
        // Predicated region
        $region57: #{tpu_custom_call.1} parent=47 // pred_check
          %p337 = pneg %p94
        $region58: #{tpu_custom_call.1} parent=47 // pred_check_branch
          %339 = sbr.rel (%p337) target = $region60
        $region59: #{tpu_custom_call.1} parent=47 // pred_region
          %340 = dma.done %s333, 4096
        $region60: #{tpu_custom_call.1} parent=47 // pred_fallthru
          _
        // Predicated region
        $region61: #{tpu_custom_call.1} parent=47 // pred_check
          %p341 = pneg %p115
        $region62: #{tpu_custom_call.1} parent=47 // pred_check_branch
          %343 = sbr.rel (%p341) target = $region64
        $region63: #{tpu_custom_call.1} parent=47 // pred_region
          %344 = dma.done [#allocation9], 512
        $region64: #{tpu_custom_call.1} parent=47 // pred_fallthru
          _
        // Predicated region
        $region65: #{tpu_custom_call.1} parent=47 // pred_check
          %p345 = pneg %p157
        $region66: #{tpu_custom_call.1} parent=47 // pred_check_branch
          %347 = sbr.rel (%p345) target = $region68
        $region67: #{tpu_custom_call.1} parent=47 // pred_region
          %348 = dma.done [#allocation9], 1024
        $region68: #{tpu_custom_call.1} parent=47 // pred_fallthru
          _
        %p349 = pneg %p42
        %p350 = pneg %p39
        %s351 = sand.u32 %s26, 1
        %s352 = scalar_lea.sflag [#allocation6], %s351
        %s353 = sand.u32 %s55, 1
        %s354 = smul.addr %s353, 256
        %s355 = scalar_lea.vmem [#allocation5], %s354
        %p356 = pneg %p68
        %p357 = pneg %p65
        %s358 = sand.u32 %s26, 1
        %s359 = scalar_lea.sflag [#allocation6], %s358
        %s360 = sand.u32 %s81, 1
        %s361 = smul.addr %s360, 256
        %s362 = scalar_lea.vmem [#allocation7], %s361
        %p363 = pneg %p94
        %p364 = pneg %p91
        %p365 = pneg %p115
        %p366 = pneg %p112
        %p367 = pneg %p136
        %p368 = pneg %p133
        %p369 = pneg %p157
        %p370 = pneg %p154
        %p371 = pneg %p178
        %p372 = pneg %p175
        %p373 = pneg %p204
        %p374 = pneg %p201
        %s375 = sand.u32 %s191, 1
        %s376 = scalar_lea.sflag [#allocation4], %s375
        %s377 = sand.u32 %s191, 1
        %s378 = smul.addr %s377, 256
        %s379 = scalar_lea.vmem [#allocation11], %s378
        %s380 = smul.u32 8, %s26
        %s381 = smul.u32 8, %s26
        %s382 = smul.u32 8, %s26
        %v384 = vld [vmem:[#allocation2] sm:$0xff]
        %v385 = vld [vmem:[#allocation2 + $0x8] sm:$0xff]
        %v386 = vld [vmem:[#allocation2 + $0x10] sm:$0xff]
        %v387 = vld [vmem:[#allocation2 + $0x18] sm:$0xff]
        %v388 = vld [vmem:[%s327] sm:$0xff]
        %v389 = vld [vmem:[%s327 + $0x8] sm:$0xff]
        %v390 = vld [vmem:[%s327 + $0x10] sm:$0xff]
        %v391 = vld [vmem:[%s327 + $0x18] sm:$0xff]
        %v392 = vld [vmem:[%s327 + $0x20] sm:$0xff]
        %v393 = vld [vmem:[%s327 + $0x28] sm:$0xff]
        %v394 = vld [vmem:[%s327 + $0x30] sm:$0xff]
        %v395 = vld [vmem:[%s327 + $0x38] sm:$0xff]
        %v396 = vld [vmem:[%s327 + $0x40] sm:$0xff]
        %v397 = vld [vmem:[%s327 + $0x48] sm:$0xff]
        %v398 = vld [vmem:[%s327 + $0x50] sm:$0xff]
        %v399 = vld [vmem:[%s327 + $0x58] sm:$0xff]
        %v400 = vld [vmem:[%s327 + $0x60] sm:$0xff]
        %v401 = vld [vmem:[%s327 + $0x68] sm:$0xff]
        %v402 = vld [vmem:[%s327 + $0x70] sm:$0xff]
        %v403 = vld [vmem:[%s327 + $0x78] sm:$0xff]
        %v404 = vld [vmem:[%s327 + $0x80] sm:$0xff]
        %v405 = vld [vmem:[%s327 + $0x88] sm:$0xff]
        %v406 = vld [vmem:[%s327 + $0x90] sm:$0xff]
        %v407 = vld [vmem:[%s327 + $0x98] sm:$0xff]
        %v408 = vld [vmem:[%s327 + $0xa0] sm:$0xff]
        %v409 = vld [vmem:[%s327 + $0xa8] sm:$0xff]
        %v410 = vld [vmem:[%s327 + $0xb0] sm:$0xff]
        %v411 = vld [vmem:[%s327 + $0xb8] sm:$0xff]
        %v412 = vld [vmem:[%s327 + $0xc0] sm:$0xff]
        %v413 = vld [vmem:[%s327 + $0xc8] sm:$0xff]
        %v414 = vld [vmem:[%s327 + $0xd0] sm:$0xff]
        %v415 = vld [vmem:[%s327 + $0xd8] sm:$0xff]
        %v416 = vld [vmem:[%s327 + $0xe0] sm:$0xff]
        %v417 = vld [vmem:[%s327 + $0xe8] sm:$0xff]
        %v418 = vld [vmem:[%s327 + $0xf0] sm:$0xff]
        %v419 = vld [vmem:[%s327 + $0xf8] sm:$0xff]
        %v420 = vmul.f32 %v384, %v388
        %v421 = vmul.f32 %v385, %v389
        %v422 = vmul.f32 %v386, %v390
        %v423 = vmul.f32 %v387, %v391
        %v424 = vmul.f32 %v384, %v392
        %v425 = vmul.f32 %v385, %v393
        %v426 = vmul.f32 %v386, %v394
        %v427 = vmul.f32 %v387, %v395
        %v428 = vmul.f32 %v384, %v396
        %v429 = vmul.f32 %v385, %v397
        %v430 = vmul.f32 %v386, %v398
        %v431 = vmul.f32 %v387, %v399
        %v432 = vmul.f32 %v384, %v400
        %v433 = vmul.f32 %v385, %v401
        %v434 = vmul.f32 %v386, %v402
        %v435 = vmul.f32 %v387, %v403
        %v436 = vmul.f32 %v384, %v404
        %v437 = vmul.f32 %v385, %v405
        %v438 = vmul.f32 %v386, %v406
        %v439 = vmul.f32 %v387, %v407
        %v440 = vmul.f32 %v384, %v408
        %v441 = vmul.f32 %v385, %v409
        %v442 = vmul.f32 %v386, %v410
        %v443 = vmul.f32 %v387, %v411
        %v444 = vmul.f32 %v384, %v412
        %v445 = vmul.f32 %v385, %v413
        %v446 = vmul.f32 %v386, %v414
        %v447 = vmul.f32 %v387, %v415
        %v448 = vmul.f32 %v384, %v416
        %v449 = vmul.f32 %v385, %v417
        %v450 = vmul.f32 %v386, %v418
        %v451 = vmul.f32 %v387, %v419
        %vm452 = vcmask 261120
        %v453 = vsel %vm452, %v420, 0.0
        %454 = vadd.xlane.f32.xlu0 %v453
        %v455 = vpop.xlane.xlu0 %454
        %v456 = vsel %vm452, %v421, 0.0
        %457 = vadd.xlane.f32.xlu0 %v456
        %v458 = vpop.xlane.xlu0 %457
        %v459 = vsel %vm452, %v422, 0.0
        %460 = vadd.xlane.f32.xlu0 %v459
        %v461 = vpop.xlane.xlu0 %460
        %v462 = vsel %vm452, %v423, 0.0
        %463 = vadd.xlane.f32.xlu0 %v462
        %v464 = vpop.xlane.xlu0 %463
        %v465 = vsel %vm452, %v424, 0.0
        %466 = vadd.xlane.f32.xlu0 %v465
        %v467 = vpop.xlane.xlu0 %466
        %v468 = vsel %vm452, %v425, 0.0
        %469 = vadd.xlane.f32.xlu0 %v468
        %v470 = vpop.xlane.xlu0 %469
        %v471 = vsel %vm452, %v426, 0.0
        %472 = vadd.xlane.f32.xlu0 %v471
        %v473 = vpop.xlane.xlu0 %472
        %v474 = vsel %vm452, %v427, 0.0
        %475 = vadd.xlane.f32.xlu0 %v474
        %v476 = vpop.xlane.xlu0 %475
        %v477 = vsel %vm452, %v428, 0.0
        %478 = vadd.xlane.f32.xlu0 %v477
        %v479 = vpop.xlane.xlu0 %478
        %v480 = vsel %vm452, %v429, 0.0
        %481 = vadd.xlane.f32.xlu0 %v480
        %v482 = vpop.xlane.xlu0 %481
        %v483 = vsel %vm452, %v430, 0.0
        %484 = vadd.xlane.f32.xlu0 %v483
        %v485 = vpop.xlane.xlu0 %484
        %v486 = vsel %vm452, %v431, 0.0
        %487 = vadd.xlane.f32.xlu0 %v486
        %v488 = vpop.xlane.xlu0 %487
        %v489 = vsel %vm452, %v432, 0.0
        %490 = vadd.xlane.f32.xlu0 %v489
        %v491 = vpop.xlane.xlu0 %490
        %v492 = vsel %vm452, %v433, 0.0
        %493 = vadd.xlane.f32.xlu0 %v492
        %v494 = vpop.xlane.xlu0 %493
        %v495 = vsel %vm452, %v434, 0.0
        %496 = vadd.xlane.f32.xlu0 %v495
        %v497 = vpop.xlane.xlu0 %496
        %v498 = vsel %vm452, %v435, 0.0
        %499 = vadd.xlane.f32.xlu0 %v498
        %v500 = vpop.xlane.xlu0 %499
        %v501 = vsel %vm452, %v436, 0.0
        %502 = vadd.xlane.f32.xlu0 %v501
        %v503 = vpop.xlane.xlu0 %502
        %v504 = vsel %vm452, %v437, 0.0
        %505 = vadd.xlane.f32.xlu0 %v504
        %v506 = vpop.xlane.xlu0 %505
        %v507 = vsel %vm452, %v438, 0.0
        %508 = vadd.xlane.f32.xlu0 %v507
        %v509 = vpop.xlane.xlu0 %508
        %v510 = vsel %vm452, %v439, 0.0
        %511 = vadd.xlane.f32.xlu0 %v510
        %v512 = vpop.xlane.xlu0 %511
        %v513 = vsel %vm452, %v440, 0.0
        %514 = vadd.xlane.f32.xlu0 %v513
        %v515 = vpop.xlane.xlu0 %514
        %v516 = vsel %vm452, %v441, 0.0
        %517 = vadd.xlane.f32.xlu0 %v516
        %v518 = vpop.xlane.xlu0 %517
        %v519 = vsel %vm452, %v442, 0.0
        %520 = vadd.xlane.f32.xlu0 %v519
        %v521 = vpop.xlane.xlu0 %520
        %v522 = vsel %vm452, %v443, 0.0
        %523 = vadd.xlane.f32.xlu0 %v522
        %v524 = vpop.xlane.xlu0 %523
        %v525 = vsel %vm452, %v444, 0.0
        %526 = vadd.xlane.f32.xlu0 %v525
        %v527 = vpop.xlane.xlu0 %526
        %v528 = vsel %vm452, %v445, 0.0
        %529 = vadd.xlane.f32.xlu0 %v528
        %v530 = vpop.xlane.xlu0 %529
        %v531 = vsel %vm452, %v446, 0.0
        %532 = vadd.xlane.f32.xlu0 %v531
        %v533 = vpop.xlane.xlu0 %532
        %v534 = vsel %vm452, %v447, 0.0
        %535 = vadd.xlane.f32.xlu0 %v534
        %v536 = vpop.xlane.xlu0 %535
        %v537 = vsel %vm452, %v448, 0.0
        %538 = vadd.xlane.f32.xlu0 %v537
        %v539 = vpop.xlane.xlu0 %538
        %v540 = vsel %vm452, %v449, 0.0
        %541 = vadd.xlane.f32.xlu0 %v540
        %v542 = vpop.xlane.xlu0 %541
        %v543 = vsel %vm452, %v450, 0.0
        %544 = vadd.xlane.f32.xlu0 %v543
        %v545 = vpop.xlane.xlu0 %544
        %v546 = vsel %vm452, %v451, 0.0
        %547 = vadd.xlane.f32.xlu0 %v546
        %v548 = vpop.xlane.xlu0 %547
        %v549 = vadd.f32 %v455, 1.0
        %v550 = vadd.f32 %v458, 1.0
        %v551 = vadd.f32 %v461, 1.0
        %v552 = vadd.f32 %v464, 1.0
        %v553 = vadd.f32 %v467, 1.0
        %v554 = vadd.f32 %v470, 1.0
        %v555 = vadd.f32 %v473, 1.0
        %v556 = vadd.f32 %v476, 1.0
        %v557 = vadd.f32 %v479, 1.0
        %v558 = vadd.f32 %v482, 1.0
        %v559 = vadd.f32 %v485, 1.0
        %v560 = vadd.f32 %v488, 1.0
        %v561 = vadd.f32 %v491, 1.0
        %v562 = vadd.f32 %v494, 1.0
        %v563 = vadd.f32 %v497, 1.0
        %v564 = vadd.f32 %v500, 1.0
        %v565 = vadd.f32 %v503, 1.0
        %v566 = vadd.f32 %v506, 1.0
        %v567 = vadd.f32 %v509, 1.0
        %v568 = vadd.f32 %v512, 1.0
        %v569 = vadd.f32 %v515, 1.0
        %v570 = vadd.f32 %v518, 1.0
        %v571 = vadd.f32 %v521, 1.0
        %v572 = vadd.f32 %v524, 1.0
        %v573 = vadd.f32 %v527, 1.0
        %v574 = vadd.f32 %v530, 1.0
        %v575 = vadd.f32 %v533, 1.0
        %v576 = vadd.f32 %v536, 1.0
        %v577 = vadd.f32 %v539, 1.0
        %v578 = vadd.f32 %v542, 1.0
        %v579 = vadd.f32 %v545, 1.0
        %v580 = vadd.f32 %v548, 1.0
        %v581 = vadd.f32 %v453, %v456
        %v582 = vadd.f32 %v581, %v459
        %v583 = vadd.f32 %v582, %v462
        %v584 = vrot.slane %v583, 4
        %v585 = vadd.f32 %v583, %v584
        %v586 = vrot.slane %v585, 2
        %v587 = vadd.f32 %v585, %v586
        %v588 = vrot.slane %v587, 1
        %v589 = vadd.f32 %v587, %v588
        %v590 = vadd.f32 %v465, %v468
        %v591 = vadd.f32 %v590, %v471
        %v592 = vadd.f32 %v591, %v474
        %v593 = vrot.slane %v592, 4
        %v594 = vadd.f32 %v592, %v593
        %v595 = vrot.slane %v594, 2
        %v596 = vadd.f32 %v594, %v595
        %v597 = vrot.slane %v596, 1
        %v598 = vadd.f32 %v596, %v597
        %v599 = vadd.f32 %v477, %v480
        %v600 = vadd.f32 %v599, %v483
        %v601 = vadd.f32 %v600, %v486
        %v602 = vrot.slane %v601, 4
        %v603 = vadd.f32 %v601, %v602
        %v604 = vrot.slane %v603, 2
        %v605 = vadd.f32 %v603, %v604
        %v606 = vrot.slane %v605, 1
        %v607 = vadd.f32 %v605, %v606
        %v608 = vadd.f32 %v489, %v492
        %v609 = vadd.f32 %v608, %v495
        %v610 = vadd.f32 %v609, %v498
        %v611 = vrot.slane %v610, 4
        %v612 = vadd.f32 %v610, %v611
        %v613 = vrot.slane %v612, 2
        %v614 = vadd.f32 %v612, %v613
        %v615 = vrot.slane %v614, 1
        %v616 = vadd.f32 %v614, %v615
        %v617 = vadd.f32 %v501, %v504
        %v618 = vadd.f32 %v617, %v507
        %v619 = vadd.f32 %v618, %v510
        %v620 = vrot.slane %v619, 4
        %v621 = vadd.f32 %v619, %v620
        %v622 = vrot.slane %v621, 2
        %v623 = vadd.f32 %v621, %v622
        %v624 = vrot.slane %v623, 1
        %v625 = vadd.f32 %v623, %v624
        %v626 = vadd.f32 %v513, %v516
        %v627 = vadd.f32 %v626, %v519
        %v628 = vadd.f32 %v627, %v522
        %v629 = vrot.slane %v628, 4
        %v630 = vadd.f32 %v628, %v629
        %v631 = vrot.slane %v630, 2
        %v632 = vadd.f32 %v630, %v631
        %v633 = vrot.slane %v632, 1
        %v634 = vadd.f32 %v632, %v633
        %v635 = vadd.f32 %v525, %v528
        %v636 = vadd.f32 %v635, %v531
        %v637 = vadd.f32 %v636, %v534
        %v638 = vrot.slane %v637, 4
        %v639 = vadd.f32 %v637, %v638
        %v640 = vrot.slane %v639, 2
        %v641 = vadd.f32 %v639, %v640
        %v642 = vrot.slane %v641, 1
        %v643 = vadd.f32 %v641, %v642
        %v644 = vadd.f32 %v537, %v540
        %v645 = vadd.f32 %v644, %v543
        %v646 = vadd.f32 %v645, %v546
        %v647 = vrot.slane %v646, 4
        %v648 = vadd.f32 %v646, %v647
        %v649 = vrot.slane %v648, 2
        %v650 = vadd.f32 %v648, %v649
        %v651 = vrot.slane %v650, 1
        %v652 = vadd.f32 %v650, %v651
        %v653 = vadd.f32 %v589, 1.0
        %v654 = vadd.f32 %v598, 1.0
        %v655 = vadd.f32 %v607, 1.0
        %v656 = vadd.f32 %v616, 1.0
        %v657 = vadd.f32 %v625, 1.0
        %v658 = vadd.f32 %v634, 1.0
        %v659 = vadd.f32 %v643, 1.0
        %v660 = vadd.f32 %v652, 1.0
        %vm661 = vcmp.gt.f32.partialorder %v549, 0.0
        %vm662 = vcmp.gt.f32.partialorder %v550, 0.0
        %vm663 = vcmp.gt.f32.partialorder %v551, 0.0
        %vm664 = vcmp.gt.f32.partialorder %v552, 0.0
        %vm665 = vcmp.gt.f32.partialorder %v553, 0.0
        %vm666 = vcmp.gt.f32.partialorder %v554, 0.0
        %vm667 = vcmp.gt.f32.partialorder %v555, 0.0
        %vm668 = vcmp.gt.f32.partialorder %v556, 0.0
        %vm669 = vcmp.gt.f32.partialorder %v557, 0.0
        %vm670 = vcmp.gt.f32.partialorder %v558, 0.0
        %vm671 = vcmp.gt.f32.partialorder %v559, 0.0
        %vm672 = vcmp.gt.f32.partialorder %v560, 0.0
        %vm673 = vcmp.gt.f32.partialorder %v561, 0.0
        %vm674 = vcmp.gt.f32.partialorder %v562, 0.0
        %vm675 = vcmp.gt.f32.partialorder %v563, 0.0
        %vm676 = vcmp.gt.f32.partialorder %v564, 0.0
        %vm677 = vcmp.gt.f32.partialorder %v565, 0.0
        %vm678 = vcmp.gt.f32.partialorder %v566, 0.0
        %vm679 = vcmp.gt.f32.partialorder %v567, 0.0
        %vm680 = vcmp.gt.f32.partialorder %v568, 0.0
        %vm681 = vcmp.gt.f32.partialorder %v569, 0.0
        %vm682 = vcmp.gt.f32.partialorder %v570, 0.0
        %vm683 = vcmp.gt.f32.partialorder %v571, 0.0
        %vm684 = vcmp.gt.f32.partialorder %v572, 0.0
        %vm685 = vcmp.gt.f32.partialorder %v573, 0.0
        %vm686 = vcmp.gt.f32.partialorder %v574, 0.0
        %vm687 = vcmp.gt.f32.partialorder %v575, 0.0
        %vm688 = vcmp.gt.f32.partialorder %v576, 0.0
        %vm689 = vcmp.gt.f32.partialorder %v577, 0.0
        %vm690 = vcmp.gt.f32.partialorder %v578, 0.0
        %vm691 = vcmp.gt.f32.partialorder %v579, 0.0
        %vm692 = vcmp.gt.f32.partialorder %v580, 0.0
        %v693 = vrsqrt.pop %v549
        %v694 = vrsqrt.pop %v550
        %v695 = vrsqrt.pop %v551
        %v696 = vrsqrt.pop %v552
        %v697 = vrsqrt.pop %v553
        %v698 = vrsqrt.pop %v554
        %v699 = vrsqrt.pop %v555
        %v700 = vrsqrt.pop %v556
        %v701 = vrsqrt.pop %v557
        %v702 = vrsqrt.pop %v558
        %v703 = vrsqrt.pop %v559
        %v704 = vrsqrt.pop %v560
        %v705 = vrsqrt.pop %v561
        %v706 = vrsqrt.pop %v562
        %v707 = vrsqrt.pop %v563
        %v708 = vrsqrt.pop %v564
        %v709 = vrsqrt.pop %v565
        %v710 = vrsqrt.pop %v566
        %v711 = vrsqrt.pop %v567
        %v712 = vrsqrt.pop %v568
        %v713 = vrsqrt.pop %v569
        %v714 = vrsqrt.pop %v570
        %v715 = vrsqrt.pop %v571
        %v716 = vrsqrt.pop %v572
        %v717 = vrsqrt.pop %v573
        %v718 = vrsqrt.pop %v574
        %v719 = vrsqrt.pop %v575
        %v720 = vrsqrt.pop %v576
        %v721 = vrsqrt.pop %v577
        %v722 = vrsqrt.pop %v578
        %v723 = vrsqrt.pop %v579
        %v724 = vrsqrt.pop %v580
        %v725 = vsel %vm661, %v693, 0.0
        %v726 = vsel %vm662, %v694, 0.0
        %v727 = vsel %vm663, %v695, 0.0
        %v728 = vsel %vm664, %v696, 0.0
        %v729 = vsel %vm665, %v697, 0.0
        %v730 = vsel %vm666, %v698, 0.0
        %v731 = vsel %vm667, %v699, 0.0
        %v732 = vsel %vm668, %v700, 0.0
        %v733 = vsel %vm669, %v701, 0.0
        %v734 = vsel %vm670, %v702, 0.0
        %v735 = vsel %vm671, %v703, 0.0
        %v736 = vsel %vm672, %v704, 0.0
        %v737 = vsel %vm673, %v705, 0.0
        %v738 = vsel %vm674, %v706, 0.0
        %v739 = vsel %vm675, %v707, 0.0
        %v740 = vsel %vm676, %v708, 0.0
        %v741 = vsel %vm677, %v709, 0.0
        %v742 = vsel %vm678, %v710, 0.0
        %v743 = vsel %vm679, %v711, 0.0
        %v744 = vsel %vm680, %v712, 0.0
        %v745 = vsel %vm681, %v713, 0.0
        %v746 = vsel %vm682, %v714, 0.0
        %v747 = vsel %vm683, %v715, 0.0
        %v748 = vsel %vm684, %v716, 0.0
        %v749 = vsel %vm685, %v717, 0.0
        %v750 = vsel %vm686, %v718, 0.0
        %v751 = vsel %vm687, %v719, 0.0
        %v752 = vsel %vm688, %v720, 0.0
        %v753 = vsel %vm689, %v721, 0.0
        %v754 = vsel %vm690, %v722, 0.0
        %v755 = vsel %vm691, %v723, 0.0
        %v756 = vsel %vm692, %v724, 0.0
        %vm757 = vcmp.gt.f32.partialorder %v653, 0.0
        %vm758 = vcmp.gt.f32.partialorder %v654, 0.0
        %vm759 = vcmp.gt.f32.partialorder %v655, 0.0
        %vm760 = vcmp.gt.f32.partialorder %v656, 0.0
        %vm761 = vcmp.gt.f32.partialorder %v657, 0.0
        %vm762 = vcmp.gt.f32.partialorder %v658, 0.0
        %vm763 = vcmp.gt.f32.partialorder %v659, 0.0
        %vm764 = vcmp.gt.f32.partialorder %v660, 0.0
        %v765 = vrsqrt.pop %v653
        %v766 = vrsqrt.pop %v654
        %v767 = vrsqrt.pop %v655
        %v768 = vrsqrt.pop %v656
        %v769 = vrsqrt.pop %v657
        %v770 = vrsqrt.pop %v658
        %v771 = vrsqrt.pop %v659
        %v772 = vrsqrt.pop %v660
        %v773 = vsel %vm757, %v765, 0.0
        %v774 = vsel %vm758, %v766, 0.0
        %v775 = vsel %vm759, %v767, 0.0
        %v776 = vsel %vm760, %v768, 0.0
        %v777 = vsel %vm761, %v769, 0.0
        %v778 = vsel %vm762, %v770, 0.0
        %v779 = vsel %vm763, %v771, 0.0
        %v780 = vsel %vm764, %v772, 0.0
        %v781 = vmul.f32 %v725, %v725
        %v782 = vmul.f32 %v726, %v726
        %v783 = vmul.f32 %v727, %v727
        %v784 = vmul.f32 %v728, %v728
        %v785 = vmul.f32 %v729, %v729
        %v786 = vmul.f32 %v730, %v730
        %v787 = vmul.f32 %v731, %v731
        %v788 = vmul.f32 %v732, %v732
        %v789 = vmul.f32 %v733, %v733
        %v790 = vmul.f32 %v734, %v734
        %v791 = vmul.f32 %v735, %v735
        %v792 = vmul.f32 %v736, %v736
        %v793 = vmul.f32 %v737, %v737
        %v794 = vmul.f32 %v738, %v738
        %v795 = vmul.f32 %v739, %v739
        %v796 = vmul.f32 %v740, %v740
        %v797 = vmul.f32 %v741, %v741
        %v798 = vmul.f32 %v742, %v742
        %v799 = vmul.f32 %v743, %v743
        %v800 = vmul.f32 %v744, %v744
        %v801 = vmul.f32 %v745, %v745
        %v802 = vmul.f32 %v746, %v746
        %v803 = vmul.f32 %v747, %v747
        %v804 = vmul.f32 %v748, %v748
        %v805 = vmul.f32 %v749, %v749
        %v806 = vmul.f32 %v750, %v750
        %v807 = vmul.f32 %v751, %v751
        %v808 = vmul.f32 %v752, %v752
        %v809 = vmul.f32 %v753, %v753
        %v810 = vmul.f32 %v754, %v754
        %v811 = vmul.f32 %v755, %v755
        %v812 = vmul.f32 %v756, %v756
        %v813 = vmul.f32 %v725, %v420
        %v814 = vmul.f32 %v726, %v421
        %v815 = vmul.f32 %v727, %v422
        %v816 = vmul.f32 %v728, %v423
        %v817 = vmul.f32 %v729, %v424
        %v818 = vmul.f32 %v730, %v425
        %v819 = vmul.f32 %v731, %v426
        %v820 = vmul.f32 %v732, %v427
        %v821 = vmul.f32 %v733, %v428
        %v822 = vmul.f32 %v734, %v429
        %v823 = vmul.f32 %v735, %v430
        %v824 = vmul.f32 %v736, %v431
        %v825 = vmul.f32 %v737, %v432
        %v826 = vmul.f32 %v738, %v433
        %v827 = vmul.f32 %v739, %v434
        %v828 = vmul.f32 %v740, %v435
        %v829 = vmul.f32 %v741, %v436
        %v830 = vmul.f32 %v742, %v437
        %v831 = vmul.f32 %v743, %v438
        %v832 = vmul.f32 %v744, %v439
        %v833 = vmul.f32 %v745, %v440
        %v834 = vmul.f32 %v746, %v441
        %v835 = vmul.f32 %v747, %v442
        %v836 = vmul.f32 %v748, %v443
        %v837 = vmul.f32 %v749, %v444
        %v838 = vmul.f32 %v750, %v445
        %v839 = vmul.f32 %v751, %v446
        %v840 = vmul.f32 %v752, %v447
        %v841 = vmul.f32 %v753, %v448
        %v842 = vmul.f32 %v754, %v449
        %v843 = vmul.f32 %v755, %v450
        %v844 = vmul.f32 %v756, %v451
        %v845 = vmul.f32 %v813, %v773
        %v846 = vmul.f32 %v814, %v773
        %v847 = vmul.f32 %v815, %v773
        %v848 = vmul.f32 %v816, %v773
        %v849 = vmul.f32 %v817, %v774
        %v850 = vmul.f32 %v818, %v774
        %v851 = vmul.f32 %v819, %v774
        %v852 = vmul.f32 %v820, %v774
        %v853 = vmul.f32 %v821, %v775
        %v854 = vmul.f32 %v822, %v775
        %v855 = vmul.f32 %v823, %v775
        %v856 = vmul.f32 %v824, %v775
        %v857 = vmul.f32 %v825, %v776
        %v858 = vmul.f32 %v826, %v776
        %v859 = vmul.f32 %v827, %v776
        %v860 = vmul.f32 %v828, %v776
        %v861 = vmul.f32 %v829, %v777
        %v862 = vmul.f32 %v830, %v777
        %v863 = vmul.f32 %v831, %v777
        %v864 = vmul.f32 %v832, %v777
        %v865 = vmul.f32 %v833, %v778
        %v866 = vmul.f32 %v834, %v778
        %v867 = vmul.f32 %v835, %v778
        %v868 = vmul.f32 %v836, %v778
        %v869 = vmul.f32 %v837, %v779
        %v870 = vmul.f32 %v838, %v779
        %v871 = vmul.f32 %v839, %v779
        %v872 = vmul.f32 %v840, %v779
        %v873 = vmul.f32 %v841, %v780
        %v874 = vmul.f32 %v842, %v780
        %v875 = vmul.f32 %v843, %v780
        %v876 = vmul.f32 %v844, %v780
        %v877 = vpack.c.bf16 %v846, %v845
        %v878 = vpack.c.bf16 %v848, %v847
        %v879 = vpack.c.bf16 %v850, %v849
        %v880 = vpack.c.bf16 %v852, %v851
        %v881 = vpack.c.bf16 %v854, %v853
        %v882 = vpack.c.bf16 %v856, %v855
        %v883 = vpack.c.bf16 %v858, %v857
        %v884 = vpack.c.bf16 %v860, %v859
        %v885 = vpack.c.bf16 %v862, %v861
        %v886 = vpack.c.bf16 %v864, %v863
        %v887 = vpack.c.bf16 %v866, %v865
        %v888 = vpack.c.bf16 %v868, %v867
        %v889 = vpack.c.bf16 %v870, %v869
        %v890 = vpack.c.bf16 %v872, %v871
        %v891 = vpack.c.bf16 %v874, %v873
        %v892 = vpack.c.bf16 %v876, %v875
        %v893 = vld [vmem:[%s336] sm:$0xff]
        %v894 = vld [vmem:[%s336 + $0x8] sm:$0xff]
        %v895 = vld [vmem:[%s336 + $0x10] sm:$0xff]
        %v896 = vld [vmem:[%s336 + $0x18] sm:$0xff]
        %v897 = vld [vmem:[%s336 + $0x20] sm:$0xff]
        %v898 = vld [vmem:[%s336 + $0x28] sm:$0xff]
        %v899 = vld [vmem:[%s336 + $0x30] sm:$0xff]
        %v900 = vld [vmem:[%s336 + $0x38] sm:$0xff]
        %v901 = vld [vmem:[%s336 + $0x40] sm:$0xff]
        %v902 = vld [vmem:[%s336 + $0x48] sm:$0xff]
        %v903 = vld [vmem:[%s336 + $0x50] sm:$0xff]
        %v904 = vld [vmem:[%s336 + $0x58] sm:$0xff]
        %v905 = vld [vmem:[%s336 + $0x60] sm:$0xff]
        %v906 = vld [vmem:[%s336 + $0x68] sm:$0xff]
        %v907 = vld [vmem:[%s336 + $0x70] sm:$0xff]
        %v908 = vld [vmem:[%s336 + $0x78] sm:$0xff]
        %v909 = vld [vmem:[%s336 + $0x80] sm:$0xff]
        %v910 = vld [vmem:[%s336 + $0x88] sm:$0xff]
        %v911 = vld [vmem:[%s336 + $0x90] sm:$0xff]
        %v912 = vld [vmem:[%s336 + $0x98] sm:$0xff]
        %v913 = vld [vmem:[%s336 + $0xa0] sm:$0xff]
        %v914 = vld [vmem:[%s336 + $0xa8] sm:$0xff]
        %v915 = vld [vmem:[%s336 + $0xb0] sm:$0xff]
        %v916 = vld [vmem:[%s336 + $0xb8] sm:$0xff]
        %v917 = vld [vmem:[%s336 + $0xc0] sm:$0xff]
        %v918 = vld [vmem:[%s336 + $0xc8] sm:$0xff]
        %v919 = vld [vmem:[%s336 + $0xd0] sm:$0xff]
        %v920 = vld [vmem:[%s336 + $0xd8] sm:$0xff]
        %v921 = vld [vmem:[%s336 + $0xe0] sm:$0xff]
        %v922 = vld [vmem:[%s336 + $0xe8] sm:$0xff]
        %v923 = vld [vmem:[%s336 + $0xf0] sm:$0xff]
        %v924 = vld [vmem:[%s336 + $0xf8] sm:$0xff]
        %v925 = vpack.c.bf16 %v894, %v893
        %v926 = vpack.c.bf16 %v896, %v895
        %v927 = vpack.c.bf16 %v898, %v897
        %v928 = vpack.c.bf16 %v900, %v899
        %v929 = vpack.c.bf16 %v902, %v901
        %v930 = vpack.c.bf16 %v904, %v903
        %v931 = vpack.c.bf16 %v906, %v905
        %v932 = vpack.c.bf16 %v908, %v907
        %v933 = vpack.c.bf16 %v910, %v909
        %v934 = vpack.c.bf16 %v912, %v911
        %v935 = vpack.c.bf16 %v914, %v913
        %v936 = vpack.c.bf16 %v916, %v915
        %v937 = vpack.c.bf16 %v918, %v917
        %v938 = vpack.c.bf16 %v920, %v919
        %v939 = vpack.c.bf16 %v922, %v921
        %v940 = vpack.c.bf16 %v924, %v923
        %v941 = vld [vmem:[#allocation8] sm:$0xf]
        %v942 = vld [vmem:[#allocation8 + $0x4] sm:$0xf]
        %v943 = vld [vmem:[#allocation8 + $0x8] sm:$0xf]
        %v944 = vld [vmem:[#allocation8 + $0xc] sm:$0xf]
        %v945 = vld [vmem:[#allocation8 + $0x10] sm:$0xf]
        %v946 = vld [vmem:[#allocation8 + $0x14] sm:$0xf]
        %v947 = vld [vmem:[#allocation8 + $0x18] sm:$0xf]
        %v948 = vld [vmem:[#allocation8 + $0x1c] sm:$0xf]
        %v957 = vunpack.c.l.b16 %v941
        %v958 = vunpack.c.l.b16 %v942
        %v959 = vunpack.c.l.b16 %v943
        %v960 = vunpack.c.l.b16 %v944
        %v961 = vunpack.c.l.b16 %v945
        %v962 = vunpack.c.l.b16 %v946
        %v963 = vunpack.c.l.b16 %v947
        %v964 = vunpack.c.l.b16 %v948
        %v965 = vpack.c.b16 %v958, %v957
        %v966 = vpack.c.b16 %v960, %v959
        %v967 = vpack.c.b16 %v962, %v961
        %v968 = vpack.c.b16 %v964, %v963
        %vm973 = vcmask 523264
        %v975 = vsel %vm973, %v925, 0
        %v978 = vsel %vm973, %v926, 0
        %v981 = vsel %vm973, %v927, 0
        %v984 = vsel %vm973, %v928, 0
        %v987 = vsel %vm973, %v929, 0
        %v990 = vsel %vm973, %v930, 0
        %v993 = vsel %vm973, %v931, 0
        %v996 = vsel %vm973, %v932, 0
        %v999 = vsel %vm973, %v933, 0
        %v1002 = vsel %vm973, %v934, 0
        %v1005 = vsel %vm973, %v935, 0
        %v1008 = vsel %vm973, %v936, 0
        %v1011 = vsel %vm973, %v937, 0
        %v1014 = vsel %vm973, %v938, 0
        %v1017 = vsel %vm973, %v939, 0
        %v1020 = vsel %vm973, %v940, 0
        %1022 = vmatprep.subr.bf16.mxu0 0
        %1023 = vmatpush1.bf16.msra.mxu0 %v965
        %1024 = vmatprep.subr.bf16.mxu0 0
        %1025 = vmatpush1.bf16.msra.mxu0 %v966
        %1026 = vmatprep.subr.bf16.mxu0 0
        %1027 = vmatpush1.bf16.msra.mxu0 %v967
        %1028 = vmatprep.subr.bf16.mxu0 0
        %1029 = vmatpush1.bf16.msra.mxu0 %v968
        %1030 = vmatprep.subr.bf16.mxu0 0
        %1031 = vmatpush1.bf16.msra.mxu0 0
        %1032 = vmatprep.subr.bf16.mxu0 0
        %1033 = vmatpush1.bf16.msra.mxu0 0
        %1034 = vmatprep.subr.bf16.mxu0 0
        %1035 = vmatpush1.bf16.msra.mxu0 0
        %1036 = vmatprep.subr.bf16.mxu0 0
        %1037 = vmatpush1.bf16.msra.mxu0 0
        %1038 = vmatprep.subr.bf16.mxu0 0
        %1039 = vmatpush1.bf16.msra.mxu0 0
        %1040 = vmatprep.subr.bf16.mxu0 0
        %1041 = vmatpush1.bf16.msra.mxu0 0
        %1042 = vmatprep.subr.bf16.mxu0 0
        %1043 = vmatpush1.bf16.msra.mxu0 0
        %1044 = vmatprep.subr.bf16.mxu0 0
        %1045 = vmatpush1.bf16.msra.mxu0 0
        %1046 = vmatprep.subr.bf16.mxu0 0
        %1047 = vmatpush1.bf16.msra.mxu0 0
        %1048 = vmatprep.subr.bf16.mxu0 0
        %1049 = vmatpush1.bf16.msra.mxu0 0
        %1050 = vmatprep.subr.bf16.mxu0 0
        %1051 = vmatpush1.bf16.msra.mxu0 0
        %1052 = vmatprep.subr.bf16.mxu0 0
        %1053 = vmatpush1.bf16.msra.mxu0 0
        %1054 = vmatprep.mubr.bf16.mxu0 0
        %1055 = vmatmul.mubr.bf16.gmra.mrb[0].mxu0 %v975
        %v1056 = vpop.f32.mrb[0].mxu0
        %v1057 = vadd.f32 0.0, %v1056
        %v1058 = vpop.f32.mrb[0].mxu0
        %v1059 = vpop.f32.mrb[0].mxu0
        %v1060 = vadd.f32 0.0, %v1059
        %v1061 = vpop.f32.mrb[0].mxu0
        %1062 = vmatprep.mubr.bf16.mxu0 0
        %1063 = vmatmul.mubr.bf16.gmra.mrb[0].mxu0 %v978
        %v1064 = vpop.f32.mrb[0].mxu0
        %v1065 = vadd.f32 0.0, %v1064
        %v1066 = vpop.f32.mrb[0].mxu0
        %v1067 = vpop.f32.mrb[0].mxu0
        %v1068 = vadd.f32 0.0, %v1067
        %v1069 = vpop.f32.mrb[0].mxu0
        %1070 = vmatprep.mubr.bf16.mxu0 0
        %1071 = vmatmul.mubr.bf16.gmra.mrb[0].mxu0 %v981
        %v1072 = vpop.f32.mrb[0].mxu0
        %v1073 = vadd.f32 0.0, %v1072
        %v1074 = vpop.f32.mrb[0].mxu0
        %v1075 = vpop.f32.mrb[0].mxu0
        %v1076 = vadd.f32 0.0, %v1075
        %v1077 = vpop.f32.mrb[0].mxu0
        %1078 = vmatprep.mubr.bf16.mxu0 0
        %1079 = vmatmul.mubr.bf16.gmra.mrb[0].mxu0 %v984
        %v1080 = vpop.f32.mrb[0].mxu0
        %v1081 = vadd.f32 0.0, %v1080
        %v1082 = vpop.f32.mrb[0].mxu0
        %v1083 = vpop.f32.mrb[0].mxu0
        %v1084 = vadd.f32 0.0, %v1083
        %v1085 = vpop.f32.mrb[0].mxu0
        %1086 = vmatprep.mubr.bf16.mxu0 0
        %1087 = vmatmul.mubr.bf16.gmra.mrb[0].mxu0 %v987
        %v1088 = vpop.f32.mrb[0].mxu0
        %v1089 = vadd.f32 0.0, %v1088
        %v1090 = vpop.f32.mrb[0].mxu0
        %v1091 = vpop.f32.mrb[0].mxu0
        %v1092 = vadd.f32 0.0, %v1091
        %v1093 = vpop.f32.mrb[0].mxu0
        %1094 = vmatprep.mubr.bf16.mxu0 0
        %1095 = vmatmul.mubr.bf16.gmra.mrb[0].mxu0 %v990
        %v1096 = vpop.f32.mrb[0].mxu0
        %v1097 = vadd.f32 0.0, %v1096
        %v1098 = vpop.f32.mrb[0].mxu0
        %v1099 = vpop.f32.mrb[0].mxu0
        %v1100 = vadd.f32 0.0, %v1099
        %v1101 = vpop.f32.mrb[0].mxu0
        %1102 = vmatprep.mubr.bf16.mxu0 0
        %1103 = vmatmul.mubr.bf16.gmra.mrb[0].mxu0 %v993
        %v1104 = vpop.f32.mrb[0].mxu0
        %v1105 = vadd.f32 0.0, %v1104
        %v1106 = vpop.f32.mrb[0].mxu0
        %v1107 = vpop.f32.mrb[0].mxu0
        %v1108 = vadd.f32 0.0, %v1107
        %v1109 = vpop.f32.mrb[0].mxu0
        %1110 = vmatprep.mubr.bf16.mxu0 0
        %1111 = vmatmul.mubr.bf16.gmra.mrb[0].mxu0 %v996
        %v1112 = vpop.f32.mrb[0].mxu0
        %v1113 = vadd.f32 0.0, %v1112
        %v1114 = vpop.f32.mrb[0].mxu0
        %v1115 = vpop.f32.mrb[0].mxu0
        %v1116 = vadd.f32 0.0, %v1115
        %v1117 = vpop.f32.mrb[0].mxu0
        %1118 = vmatprep.mubr.bf16.mxu0 0
        %1119 = vmatmul.mubr.bf16.gmra.mrb[0].mxu0 %v999
        %v1120 = vpop.f32.mrb[0].mxu0
        %v1121 = vadd.f32 0.0, %v1120
        %v1122 = vpop.f32.mrb[0].mxu0
        %v1123 = vpop.f32.mrb[0].mxu0
        %v1124 = vadd.f32 0.0, %v1123
        %v1125 = vpop.f32.mrb[0].mxu0
        %1126 = vmatprep.mubr.bf16.mxu0 0
        %1127 = vmatmul.mubr.bf16.gmra.mrb[0].mxu0 %v1002
        %v1128 = vpop.f32.mrb[0].mxu0
        %v1129 = vadd.f32 0.0, %v1128
        %v1130 = vpop.f32.mrb[0].mxu0
        %v1131 = vpop.f32.mrb[0].mxu0
        %v1132 = vadd.f32 0.0, %v1131
        %v1133 = vpop.f32.mrb[0].mxu0
        %1134 = vmatprep.mubr.bf16.mxu0 0
        %1135 = vmatmul.mubr.bf16.gmra.mrb[0].mxu0 %v1005
        %v1136 = vpop.f32.mrb[0].mxu0
        %v1137 = vadd.f32 0.0, %v1136
        %v1138 = vpop.f32.mrb[0].mxu0
        %v1139 = vpop.f32.mrb[0].mxu0
        %v1140 = vadd.f32 0.0, %v1139
        %v1141 = vpop.f32.mrb[0].mxu0
        %1142 = vmatprep.mubr.bf16.mxu0 0
        %1143 = vmatmul.mubr.bf16.gmra.mrb[0].mxu0 %v1008
        %v1144 = vpop.f32.mrb[0].mxu0
        %v1145 = vadd.f32 0.0, %v1144
        %v1146 = vpop.f32.mrb[0].mxu0
        %v1147 = vpop.f32.mrb[0].mxu0
        %v1148 = vadd.f32 0.0, %v1147
        %v1149 = vpop.f32.mrb[0].mxu0
        %1150 = vmatprep.mubr.bf16.mxu0 0
        %1151 = vmatmul.mubr.bf16.gmra.mrb[0].mxu0 %v1011
        %v1152 = vpop.f32.mrb[0].mxu0
        %v1153 = vadd.f32 0.0, %v1152
        %v1154 = vpop.f32.mrb[0].mxu0
        %v1155 = vpop.f32.mrb[0].mxu0
        %v1156 = vadd.f32 0.0, %v1155
        %v1157 = vpop.f32.mrb[0].mxu0
        %1158 = vmatprep.mubr.bf16.mxu0 0
        %1159 = vmatmul.mubr.bf16.gmra.mrb[0].mxu0 %v1014
        %v1160 = vpop.f32.mrb[0].mxu0
        %v1161 = vadd.f32 0.0, %v1160
        %v1162 = vpop.f32.mrb[0].mxu0
        %v1163 = vpop.f32.mrb[0].mxu0
        %v1164 = vadd.f32 0.0, %v1163
        %v1165 = vpop.f32.mrb[0].mxu0
        %1166 = vmatprep.mubr.bf16.mxu0 0
        %1167 = vmatmul.mubr.bf16.gmra.mrb[0].mxu0 %v1017
        %v1168 = vpop.f32.mrb[0].mxu0
        %v1169 = vadd.f32 0.0, %v1168
        %v1170 = vpop.f32.mrb[0].mxu0
        %v1171 = vpop.f32.mrb[0].mxu0
        %v1172 = vadd.f32 0.0, %v1171
        %v1173 = vpop.f32.mrb[0].mxu0
        %1174 = vmatprep.mubr.bf16.mxu0 0
        %1175 = vmatmul.mubr.bf16.gmra.mrb[0].mxu0 %v1020
        %v1176 = vpop.f32.mrb[0].mxu0
        %v1177 = vadd.f32 0.0, %v1176
        %v1178 = vpop.f32.mrb[0].mxu0
        %v1179 = vpop.f32.mrb[0].mxu0
        %v1180 = vadd.f32 0.0, %v1179
        %v1181 = vpop.f32.mrb[0].mxu0
        %1182 = vdwg.mxu0
        %v1183 = vpack.c.bf16 %v1060, %v1057
        %v1184 = vpack.c.bf16 %v1068, %v1065
        %v1185 = vpack.c.bf16 %v1076, %v1073
        %v1186 = vpack.c.bf16 %v1084, %v1081
        %v1187 = vpack.c.bf16 %v1092, %v1089
        %v1188 = vpack.c.bf16 %v1100, %v1097
        %v1189 = vpack.c.bf16 %v1108, %v1105
        %v1190 = vpack.c.bf16 %v1116, %v1113
        %v1191 = vpack.c.bf16 %v1124, %v1121
        %v1192 = vpack.c.bf16 %v1132, %v1129
        %v1193 = vpack.c.bf16 %v1140, %v1137
        %v1194 = vpack.c.bf16 %v1148, %v1145
        %v1195 = vpack.c.bf16 %v1156, %v1153
        %v1196 = vpack.c.bf16 %v1164, %v1161
        %v1197 = vpack.c.bf16 %v1172, %v1169
        %v1198 = vpack.c.bf16 %v1180, %v1177
        %v1199 = vmul.f32 %v781, %v1057
        %v1200 = vmul.f32 %v782, %v1060
        %v1201 = vmul.f32 %v783, %v1065
        %v1202 = vmul.f32 %v784, %v1068
        %v1203 = vmul.f32 %v785, %v1073
        %v1204 = vmul.f32 %v786, %v1076
        %v1205 = vmul.f32 %v787, %v1081
        %v1206 = vmul.f32 %v788, %v1084
        %v1207 = vmul.f32 %v789, %v1089
        %v1208 = vmul.f32 %v790, %v1092
        %v1209 = vmul.f32 %v791, %v1097
        %v1210 = vmul.f32 %v792, %v1100
        %v1211 = vmul.f32 %v793, %v1105
        %v1212 = vmul.f32 %v794, %v1108
        %v1213 = vmul.f32 %v795, %v1113
        %v1214 = vmul.f32 %v796, %v1116
        %v1215 = vmul.f32 %v797, %v1121
        %v1216 = vmul.f32 %v798, %v1124
        %v1217 = vmul.f32 %v799, %v1129
        %v1218 = vmul.f32 %v800, %v1132
        %v1219 = vmul.f32 %v801, %v1137
        %v1220 = vmul.f32 %v802, %v1140
        %v1221 = vmul.f32 %v803, %v1145
        %v1222 = vmul.f32 %v804, %v1148
        %v1223 = vmul.f32 %v805, %v1153
        %v1224 = vmul.f32 %v806, %v1156
        %v1225 = vmul.f32 %v807, %v1161
        %v1226 = vmul.f32 %v808, %v1164
        %v1227 = vmul.f32 %v809, %v1169
        %v1228 = vmul.f32 %v810, %v1172
        %v1229 = vmul.f32 %v811, %v1177
        %v1230 = vmul.f32 %v812, %v1180
        %v1232 = vsel %vm452, %v877, 0
        %v1235 = vsel %vm452, %v878, 0
        %1237 = vmatprep.subr.bf16.mxu0 0
        %1238 = vmatpush1.bf16.msra.mxu0 %v1183
        %1239 = vmatprep.subr.bf16.mxu0 0
        %1240 = vmatpush1.bf16.msra.mxu0 %v1184
        %1241 = vmatprep.subr.bf16.mxu0 0
        %1242 = vmatpush1.bf16.msra.mxu0 0
        %1243 = vmatprep.subr.bf16.mxu0 0
        %1244 = vmatpush1.bf16.msra.mxu0 0
        %1245 = vmatprep.subr.bf16.mxu0 0
        %1246 = vmatpush1.bf16.msra.mxu0 0
        %1247 = vmatprep.subr.bf16.mxu0 0
        %1248 = vmatpush1.bf16.msra.mxu0 0
        %1249 = vmatprep.subr.bf16.mxu0 0
        %1250 = vmatpush1.bf16.msra.mxu0 0
        %1251 = vmatprep.subr.bf16.mxu0 0
        %1252 = vmatpush1.bf16.msra.mxu0 0
        %1253 = vmatprep.subr.bf16.mxu0 0
        %1254 = vmatpush1.bf16.msra.mxu0 0
        %1255 = vmatprep.subr.bf16.mxu0 0
        %1256 = vmatpush1.bf16.msra.mxu0 0
        %1257 = vmatprep.subr.bf16.mxu0 0
        %1258 = vmatpush1.bf16.msra.mxu0 0
        %1259 = vmatprep.subr.bf16.mxu0 0
        %1260 = vmatpush1.bf16.msra.mxu0 0
        %1261 = vmatprep.subr.bf16.mxu0 0
        %1262 = vmatpush1.bf16.msra.mxu0 0
        %1263 = vmatprep.subr.bf16.mxu0 0
        %1264 = vmatpush1.bf16.msra.mxu0 0
        %1265 = vmatprep.subr.bf16.mxu0 0
        %1266 = vmatpush1.bf16.msra.mxu0 0
        %1267 = vmatprep.subr.bf16.mxu0 0
        %1268 = vmatpush1.bf16.msra.mxu0 0
        %1269 = vmatprep.mubr.bf16.mxu0 0
        %1270 = vmatmul.mubr.bf16.gmra.mrb[0].mxu0 %v1232
        %v1271 = vpop.f32.mrb[0].mxu0
        %v1272 = vadd.f32 %v1199, %v1271
        %v1273 = vpop.f32.mrb[0].mxu0
        %v1274 = vpop.f32.mrb[0].mxu0
        %v1275 = vadd.f32 %v1200, %v1274
        %v1276 = vpop.f32.mrb[0].mxu0
        %1277 = vmatprep.mubr.bf16.mxu0 0
        %1278 = vmatmul.mubr.bf16.gmra.mrb[0].mxu0 %v1235
        %v1279 = vpop.f32.mrb[0].mxu0
        %v1280 = vadd.f32 %v1201, %v1279
        %v1281 = vpop.f32.mrb[0].mxu0
        %v1282 = vpop.f32.mrb[0].mxu0
        %v1283 = vadd.f32 %v1202, %v1282
        %v1284 = vpop.f32.mrb[0].mxu0
        %1285 = vdwg.mxu0
        %v1287 = vsel %vm452, %v879, 0
        %v1290 = vsel %vm452, %v880, 0
        %1292 = vmatprep.subr.bf16.mxu0 0
        %1293 = vmatpush1.bf16.msra.mxu0 %v1185
        %1294 = vmatprep.subr.bf16.mxu0 0
        %1295 = vmatpush1.bf16.msra.mxu0 %v1186
        %1296 = vmatprep.subr.bf16.mxu0 0
        %1297 = vmatpush1.bf16.msra.mxu0 0
        %1298 = vmatprep.subr.bf16.mxu0 0
        %1299 = vmatpush1.bf16.msra.mxu0 0
        %1300 = vmatprep.subr.bf16.mxu0 0
        %1301 = vmatpush1.bf16.msra.mxu0 0
        %1302 = vmatprep.subr.bf16.mxu0 0
        %1303 = vmatpush1.bf16.msra.mxu0 0
        %1304 = vmatprep.subr.bf16.mxu0 0
        %1305 = vmatpush1.bf16.msra.mxu0 0
        %1306 = vmatprep.subr.bf16.mxu0 0
        %1307 = vmatpush1.bf16.msra.mxu0 0
        %1308 = vmatprep.subr.bf16.mxu0 0
        %1309 = vmatpush1.bf16.msra.mxu0 0
        %1310 = vmatprep.subr.bf16.mxu0 0
        %1311 = vmatpush1.bf16.msra.mxu0 0
        %1312 = vmatprep.subr.bf16.mxu0 0
        %1313 = vmatpush1.bf16.msra.mxu0 0
        %1314 = vmatprep.subr.bf16.mxu0 0
        %1315 = vmatpush1.bf16.msra.mxu0 0
        %1316 = vmatprep.subr.bf16.mxu0 0
        %1317 = vmatpush1.bf16.msra.mxu0 0
        %1318 = vmatprep.subr.bf16.mxu0 0
        %1319 = vmatpush1.bf16.msra.mxu0 0
        %1320 = vmatprep.subr.bf16.mxu0 0
        %1321 = vmatpush1.bf16.msra.mxu0 0
        %1322 = vmatprep.subr.bf16.mxu0 0
        %1323 = vmatpush1.bf16.msra.mxu0 0
        %1324 = vmatprep.mubr.bf16.mxu0 0
        %1325 = vmatmul.mubr.bf16.gmra.mrb[0].mxu0 %v1287
        %v1326 = vpop.f32.mrb[0].mxu0
        %v1327 = vadd.f32 %v1203, %v1326
        %v1328 = vpop.f32.mrb[0].mxu0
        %v1329 = vpop.f32.mrb[0].mxu0
        %v1330 = vadd.f32 %v1204, %v1329
        %v1331 = vpop.f32.mrb[0].mxu0
        %1332 = vmatprep.mubr.bf16.mxu0 0
        %1333 = vmatmul.mubr.bf16.gmra.mrb[0].mxu0 %v1290
        %v1334 = vpop.f32.mrb[0].mxu0
        %v1335 = vadd.f32 %v1205, %v1334
        %v1336 = vpop.f32.mrb[0].mxu0
        %v1337 = vpop.f32.mrb[0].mxu0
        %v1338 = vadd.f32 %v1206, %v1337
        %v1339 = vpop.f32.mrb[0].mxu0
        %1340 = vdwg.mxu0
        %v1342 = vsel %vm452, %v881, 0
        %v1345 = vsel %vm452, %v882, 0
        %1347 = vmatprep.subr.bf16.mxu0 0
        %1348 = vmatpush1.bf16.msra.mxu0 %v1187
        %1349 = vmatprep.subr.bf16.mxu0 0
        %1350 = vmatpush1.bf16.msra.mxu0 %v1188
        %1351 = vmatprep.subr.bf16.mxu0 0
        %1352 = vmatpush1.bf16.msra.mxu0 0
        %1353 = vmatprep.subr.bf16.mxu0 0
        %1354 = vmatpush1.bf16.msra.mxu0 0
        %1355 = vmatprep.subr.bf16.mxu0 0
        %1356 = vmatpush1.bf16.msra.mxu0 0
        %1357 = vmatprep.subr.bf16.mxu0 0
        %1358 = vmatpush1.bf16.msra.mxu0 0
        %1359 = vmatprep.subr.bf16.mxu0 0
        %1360 = vmatpush1.bf16.msra.mxu0 0
        %1361 = vmatprep.subr.bf16.mxu0 0
        %1362 = vmatpush1.bf16.msra.mxu0 0
        %1363 = vmatprep.subr.bf16.mxu0 0
        %1364 = vmatpush1.bf16.msra.mxu0 0
        %1365 = vmatprep.subr.bf16.mxu0 0
        %1366 = vmatpush1.bf16.msra.mxu0 0
        %1367 = vmatprep.subr.bf16.mxu0 0
        %1368 = vmatpush1.bf16.msra.mxu0 0
        %1369 = vmatprep.subr.bf16.mxu0 0
        %1370 = vmatpush1.bf16.msra.mxu0 0
        %1371 = vmatprep.subr.bf16.mxu0 0
        %1372 = vmatpush1.bf16.msra.mxu0 0
        %1373 = vmatprep.subr.bf16.mxu0 0
        %1374 = vmatpush1.bf16.msra.mxu0 0
        %1375 = vmatprep.subr.bf16.mxu0 0
        %1376 = vmatpush1.bf16.msra.mxu0 0
        %1377 = vmatprep.subr.bf16.mxu0 0
        %1378 = vmatpush1.bf16.msra.mxu0 0
        %1379 = vmatprep.mubr.bf16.mxu0 0
        %1380 = vmatmul.mubr.bf16.gmra.mrb[0].mxu0 %v1342
        %v1381 = vpop.f32.mrb[0].mxu0
        %v1382 = vadd.f32 %v1207, %v1381
        %v1383 = vpop.f32.mrb[0].mxu0
        %v1384 = vpop.f32.mrb[0].mxu0
        %v1385 = vadd.f32 %v1208, %v1384
        %v1386 = vpop.f32.mrb[0].mxu0
        %1387 = vmatprep.mubr.bf16.mxu0 0
        %1388 = vmatmul.mubr.bf16.gmra.mrb[0].mxu0 %v1345
        %v1389 = vpop.f32.mrb[0].mxu0
        %v1390 = vadd.f32 %v1209, %v1389
        %v1391 = vpop.f32.mrb[0].mxu0
        %v1392 = vpop.f32.mrb[0].mxu0
        %v1393 = vadd.f32 %v1210, %v1392
        %v1394 = vpop.f32.mrb[0].mxu0
        %1395 = vdwg.mxu0
        %v1397 = vsel %vm452, %v883, 0
        %v1400 = vsel %vm452, %v884, 0
        %1402 = vmatprep.subr.bf16.mxu0 0
        %1403 = vmatpush1.bf16.msra.mxu0 %v1189
        %1404 = vmatprep.subr.bf16.mxu0 0
        %1405 = vmatpush1.bf16.msra.mxu0 %v1190
        %1406 = vmatprep.subr.bf16.mxu0 0
        %1407 = vmatpush1.bf16.msra.mxu0 0
        %1408 = vmatprep.subr.bf16.mxu0 0
        %1409 = vmatpush1.bf16.msra.mxu0 0
        %1410 = vmatprep.subr.bf16.mxu0 0
        %1411 = vmatpush1.bf16.msra.mxu0 0
        %1412 = vmatprep.subr.bf16.mxu0 0
        %1413 = vmatpush1.bf16.msra.mxu0 0
        %1414 = vmatprep.subr.bf16.mxu0 0
        %1415 = vmatpush1.bf16.msra.mxu0 0
        %1416 = vmatprep.subr.bf16.mxu0 0
        %1417 = vmatpush1.bf16.msra.mxu0 0
        %1418 = vmatprep.subr.bf16.mxu0 0
        %1419 = vmatpush1.bf16.msra.mxu0 0
        %1420 = vmatprep.subr.bf16.mxu0 0
        %1421 = vmatpush1.bf16.msra.mxu0 0
        %1422 = vmatprep.subr.bf16.mxu0 0
        %1423 = vmatpush1.bf16.msra.mxu0 0
        %1424 = vmatprep.subr.bf16.mxu0 0
        %1425 = vmatpush1.bf16.msra.mxu0 0
        %1426 = vmatprep.subr.bf16.mxu0 0
        %1427 = vmatpush1.bf16.msra.mxu0 0
        %1428 = vmatprep.subr.bf16.mxu0 0
        %1429 = vmatpush1.bf16.msra.mxu0 0
        %1430 = vmatprep.subr.bf16.mxu0 0
        %1431 = vmatpush1.bf16.msra.mxu0 0
        %1432 = vmatprep.subr.bf16.mxu0 0
        %1433 = vmatpush1.bf16.msra.mxu0 0
        %1434 = vmatprep.mubr.bf16.mxu0 0
        %1435 = vmatmul.mubr.bf16.gmra.mrb[0].mxu0 %v1397
        %v1436 = vpop.f32.mrb[0].mxu0
        %v1437 = vadd.f32 %v1211, %v1436
        %v1438 = vpop.f32.mrb[0].mxu0
        %v1439 = vpop.f32.mrb[0].mxu0
        %v1440 = vadd.f32 %v1212, %v1439
        %v1441 = vpop.f32.mrb[0].mxu0
        %1442 = vmatprep.mubr.bf16.mxu0 0
        %1443 = vmatmul.mubr.bf16.gmra.mrb[0].mxu0 %v1400
        %v1444 = vpop.f32.mrb[0].mxu0
        %v1445 = vadd.f32 %v1213, %v1444
        %v1446 = vpop.f32.mrb[0].mxu0
        %v1447 = vpop.f32.mrb[0].mxu0
        %v1448 = vadd.f32 %v1214, %v1447
        %v1449 = vpop.f32.mrb[0].mxu0
        %1450 = vdwg.mxu0
        %v1452 = vsel %vm452, %v885, 0
        %v1455 = vsel %vm452, %v886, 0
        %1457 = vmatprep.subr.bf16.mxu0 0
        %1458 = vmatpush1.bf16.msra.mxu0 %v1191
        %1459 = vmatprep.subr.bf16.mxu0 0
        %1460 = vmatpush1.bf16.msra.mxu0 %v1192
        %1461 = vmatprep.subr.bf16.mxu0 0
        %1462 = vmatpush1.bf16.msra.mxu0 0
        %1463 = vmatprep.subr.bf16.mxu0 0
        %1464 = vmatpush1.bf16.msra.mxu0 0
        %1465 = vmatprep.subr.bf16.mxu0 0
        %1466 = vmatpush1.bf16.msra.mxu0 0
        %1467 = vmatprep.subr.bf16.mxu0 0
        %1468 = vmatpush1.bf16.msra.mxu0 0
        %1469 = vmatprep.subr.bf16.mxu0 0
        %1470 = vmatpush1.bf16.msra.mxu0 0
        %1471 = vmatprep.subr.bf16.mxu0 0
        %1472 = vmatpush1.bf16.msra.mxu0 0
        %1473 = vmatprep.subr.bf16.mxu0 0
        %1474 = vmatpush1.bf16.msra.mxu0 0
        %1475 = vmatprep.subr.bf16.mxu0 0
        %1476 = vmatpush1.bf16.msra.mxu0 0
        %1477 = vmatprep.subr.bf16.mxu0 0
        %1478 = vmatpush1.bf16.msra.mxu0 0
        %1479 = vmatprep.subr.bf16.mxu0 0
        %1480 = vmatpush1.bf16.msra.mxu0 0
        %1481 = vmatprep.subr.bf16.mxu0 0
        %1482 = vmatpush1.bf16.msra.mxu0 0
        %1483 = vmatprep.subr.bf16.mxu0 0
        %1484 = vmatpush1.bf16.msra.mxu0 0
        %1485 = vmatprep.subr.bf16.mxu0 0
        %1486 = vmatpush1.bf16.msra.mxu0 0
        %1487 = vmatprep.subr.bf16.mxu0 0
        %1488 = vmatpush1.bf16.msra.mxu0 0
        %1489 = vmatprep.mubr.bf16.mxu0 0
        %1490 = vmatmul.mubr.bf16.gmra.mrb[0].mxu0 %v1452
        %v1491 = vpop.f32.mrb[0].mxu0
        %v1492 = vadd.f32 %v1215, %v1491
        %v1493 = vpop.f32.mrb[0].mxu0
        %v1494 = vpop.f32.mrb[0].mxu0
        %v1495 = vadd.f32 %v1216, %v1494
        %v1496 = vpop.f32.mrb[0].mxu0
        %1497 = vmatprep.mubr.bf16.mxu0 0
        %1498 = vmatmul.mubr.bf16.gmra.mrb[0].mxu0 %v1455
        %v1499 = vpop.f32.mrb[0].mxu0
        %v1500 = vadd.f32 %v1217, %v1499
        %v1501 = vpop.f32.mrb[0].mxu0
        %v1502 = vpop.f32.mrb[0].mxu0
        %v1503 = vadd.f32 %v1218, %v1502
        %v1504 = vpop.f32.mrb[0].mxu0
        %1505 = vdwg.mxu0
        %v1507 = vsel %vm452, %v887, 0
        %v1510 = vsel %vm452, %v888, 0
        %1512 = vmatprep.subr.bf16.mxu0 0
        %1513 = vmatpush1.bf16.msra.mxu0 %v1193
        %1514 = vmatprep.subr.bf16.mxu0 0
        %1515 = vmatpush1.bf16.msra.mxu0 %v1194
        %1516 = vmatprep.subr.bf16.mxu0 0
        %1517 = vmatpush1.bf16.msra.mxu0 0
        %1518 = vmatprep.subr.bf16.mxu0 0
        %1519 = vmatpush1.bf16.msra.mxu0 0
        %1520 = vmatprep.subr.bf16.mxu0 0
        %1521 = vmatpush1.bf16.msra.mxu0 0
        %1522 = vmatprep.subr.bf16.mxu0 0
        %1523 = vmatpush1.bf16.msra.mxu0 0
        %1524 = vmatprep.subr.bf16.mxu0 0
        %1525 = vmatpush1.bf16.msra.mxu0 0
        %1526 = vmatprep.subr.bf16.mxu0 0
        %1527 = vmatpush1.bf16.msra.mxu0 0
        %1528 = vmatprep.subr.bf16.mxu0 0
        %1529 = vmatpush1.bf16.msra.mxu0 0
        %1530 = vmatprep.subr.bf16.mxu0 0
        %1531 = vmatpush1.bf16.msra.mxu0 0
        %1532 = vmatprep.subr.bf16.mxu0 0
        %1533 = vmatpush1.bf16.msra.mxu0 0
        %1534 = vmatprep.subr.bf16.mxu0 0
        %1535 = vmatpush1.bf16.msra.mxu0 0
        %1536 = vmatprep.subr.bf16.mxu0 0
        %1537 = vmatpush1.bf16.msra.mxu0 0
        %1538 = vmatprep.subr.bf16.mxu0 0
        %1539 = vmatpush1.bf16.msra.mxu0 0
        %1540 = vmatprep.subr.bf16.mxu0 0
        %1541 = vmatpush1.bf16.msra.mxu0 0
        %1542 = vmatprep.subr.bf16.mxu0 0
        %1543 = vmatpush1.bf16.msra.mxu0 0
        %1544 = vmatprep.mubr.bf16.mxu0 0
        %1545 = vmatmul.mubr.bf16.gmra.mrb[0].mxu0 %v1507
        %v1546 = vpop.f32.mrb[0].mxu0
        %v1547 = vadd.f32 %v1219, %v1546
        %v1548 = vpop.f32.mrb[0].mxu0
        %v1549 = vpop.f32.mrb[0].mxu0
        %v1550 = vadd.f32 %v1220, %v1549
        %v1551 = vpop.f32.mrb[0].mxu0
        %1552 = vmatprep.mubr.bf16.mxu0 0
        %1553 = vmatmul.mubr.bf16.gmra.mrb[0].mxu0 %v1510
        %v1554 = vpop.f32.mrb[0].mxu0
        %v1555 = vadd.f32 %v1221, %v1554
        %v1556 = vpop.f32.mrb[0].mxu0
        %v1557 = vpop.f32.mrb[0].mxu0
        %v1558 = vadd.f32 %v1222, %v1557
        %v1559 = vpop.f32.mrb[0].mxu0
        %1560 = vdwg.mxu0
        %v1562 = vsel %vm452, %v889, 0
        %v1565 = vsel %vm452, %v890, 0
        %1567 = vmatprep.subr.bf16.mxu0 0
        %1568 = vmatpush1.bf16.msra.mxu0 %v1195
        %1569 = vmatprep.subr.bf16.mxu0 0
        %1570 = vmatpush1.bf16.msra.mxu0 %v1196
        %1571 = vmatprep.subr.bf16.mxu0 0
        %1572 = vmatpush1.bf16.msra.mxu0 0
        %1573 = vmatprep.subr.bf16.mxu0 0
        %1574 = vmatpush1.bf16.msra.mxu0 0
        %1575 = vmatprep.subr.bf16.mxu0 0
        %1576 = vmatpush1.bf16.msra.mxu0 0
        %1577 = vmatprep.subr.bf16.mxu0 0
        %1578 = vmatpush1.bf16.msra.mxu0 0
        %1579 = vmatprep.subr.bf16.mxu0 0
        %1580 = vmatpush1.bf16.msra.mxu0 0
        %1581 = vmatprep.subr.bf16.mxu0 0
        %1582 = vmatpush1.bf16.msra.mxu0 0
        %1583 = vmatprep.subr.bf16.mxu0 0
        %1584 = vmatpush1.bf16.msra.mxu0 0
        %1585 = vmatprep.subr.bf16.mxu0 0
        %1586 = vmatpush1.bf16.msra.mxu0 0
        %1587 = vmatprep.subr.bf16.mxu0 0
        %1588 = vmatpush1.bf16.msra.mxu0 0
        %1589 = vmatprep.subr.bf16.mxu0 0
        %1590 = vmatpush1.bf16.msra.mxu0 0
        %1591 = vmatprep.subr.bf16.mxu0 0
        %1592 = vmatpush1.bf16.msra.mxu0 0
        %1593 = vmatprep.subr.bf16.mxu0 0
        %1594 = vmatpush1.bf16.msra.mxu0 0
        %1595 = vmatprep.subr.bf16.mxu0 0
        %1596 = vmatpush1.bf16.msra.mxu0 0
        %1597 = vmatprep.subr.bf16.mxu0 0
        %1598 = vmatpush1.bf16.msra.mxu0 0
        %1599 = vmatprep.mubr.bf16.mxu0 0
        %1600 = vmatmul.mubr.bf16.gmra.mrb[0].mxu0 %v1562
        %v1601 = vpop.f32.mrb[0].mxu0
        %v1602 = vadd.f32 %v1223, %v1601
        %v1603 = vpop.f32.mrb[0].mxu0
        %v1604 = vpop.f32.mrb[0].mxu0
        %v1605 = vadd.f32 %v1224, %v1604
        %v1606 = vpop.f32.mrb[0].mxu0
        %1607 = vmatprep.mubr.bf16.mxu0 0
        %1608 = vmatmul.mubr.bf16.gmra.mrb[0].mxu0 %v1565
        %v1609 = vpop.f32.mrb[0].mxu0
        %v1610 = vadd.f32 %v1225, %v1609
        %v1611 = vpop.f32.mrb[0].mxu0
        %v1612 = vpop.f32.mrb[0].mxu0
        %v1613 = vadd.f32 %v1226, %v1612
        %v1614 = vpop.f32.mrb[0].mxu0
        %1615 = vdwg.mxu0
        %v1617 = vsel %vm452, %v891, 0
        %v1620 = vsel %vm452, %v892, 0
        %1622 = vmatprep.subr.bf16.mxu0 0
        %1623 = vmatpush1.bf16.msra.mxu0 %v1197
        %1624 = vmatprep.subr.bf16.mxu0 0
        %1625 = vmatpush1.bf16.msra.mxu0 %v1198
        %1626 = vmatprep.subr.bf16.mxu0 0
        %1627 = vmatpush1.bf16.msra.mxu0 0
        %1628 = vmatprep.subr.bf16.mxu0 0
        %1629 = vmatpush1.bf16.msra.mxu0 0
        %1630 = vmatprep.subr.bf16.mxu0 0
        %1631 = vmatpush1.bf16.msra.mxu0 0
        %1632 = vmatprep.subr.bf16.mxu0 0
        %1633 = vmatpush1.bf16.msra.mxu0 0
        %1634 = vmatprep.subr.bf16.mxu0 0
        %1635 = vmatpush1.bf16.msra.mxu0 0
        %1636 = vmatprep.subr.bf16.mxu0 0
        %1637 = vmatpush1.bf16.msra.mxu0 0
        %1638 = vmatprep.subr.bf16.mxu0 0
        %1639 = vmatpush1.bf16.msra.mxu0 0
        %1640 = vmatprep.subr.bf16.mxu0 0
        %1641 = vmatpush1.bf16.msra.mxu0 0
        %1642 = vmatprep.subr.bf16.mxu0 0
        %1643 = vmatpush1.bf16.msra.mxu0 0
        %1644 = vmatprep.subr.bf16.mxu0 0
        %1645 = vmatpush1.bf16.msra.mxu0 0
        %1646 = vmatprep.subr.bf16.mxu0 0
        %1647 = vmatpush1.bf16.msra.mxu0 0
        %1648 = vmatprep.subr.bf16.mxu0 0
        %1649 = vmatpush1.bf16.msra.mxu0 0
        %1650 = vmatprep.subr.bf16.mxu0 0
        %1651 = vmatpush1.bf16.msra.mxu0 0
        %1652 = vmatprep.subr.bf16.mxu0 0
        %1653 = vmatpush1.bf16.msra.mxu0 0
        %1654 = vmatprep.mubr.bf16.mxu0 0
        %1655 = vmatmul.mubr.bf16.gmra.mrb[0].mxu0 %v1617
        %v1656 = vpop.f32.mrb[0].mxu0
        %v1657 = vadd.f32 %v1227, %v1656
        %v1658 = vpop.f32.mrb[0].mxu0
        %v1659 = vpop.f32.mrb[0].mxu0
        %v1660 = vadd.f32 %v1228, %v1659
        %v1661 = vpop.f32.mrb[0].mxu0
        %1662 = vmatprep.mubr.bf16.mxu0 0
        %1663 = vmatmul.mubr.bf16.gmra.mrb[0].mxu0 %v1620
        %v1664 = vpop.f32.mrb[0].mxu0
        %v1665 = vadd.f32 %v1229, %v1664
        %v1666 = vpop.f32.mrb[0].mxu0
        %v1667 = vpop.f32.mrb[0].mxu0
        %v1668 = vadd.f32 %v1230, %v1667
        %v1669 = vpop.f32.mrb[0].mxu0
        %1670 = vdwg.mxu0
        %v1671 = vld [vmem:[%s4] sm:$0x1]
        %v1673 = vlaneseq
        %v1674 = vshrl.u32 %v1673, 7
        %v1675 = vsub.s32 0, %v1674
        %v1676 = vrot.slane %v1671, %v1675
        %v1678 = vadd.f32 %v1272, %v1676
        %v1679 = vadd.f32 %v1275, %v1676
        %v1680 = vadd.f32 %v1280, %v1676
        %v1681 = vadd.f32 %v1283, %v1676
        %v1682 = vadd.f32 %v1327, %v1676
        %v1683 = vadd.f32 %v1330, %v1676
        %v1684 = vadd.f32 %v1335, %v1676
        %v1685 = vadd.f32 %v1338, %v1676
        %v1686 = vadd.f32 %v1382, %v1676
        %v1687 = vadd.f32 %v1385, %v1676
        %v1688 = vadd.f32 %v1390, %v1676
        %v1689 = vadd.f32 %v1393, %v1676
        %v1690 = vadd.f32 %v1437, %v1676
        %v1691 = vadd.f32 %v1440, %v1676
        %v1692 = vadd.f32 %v1445, %v1676
        %v1693 = vadd.f32 %v1448, %v1676
        %v1694 = vadd.f32 %v1492, %v1676
        %v1695 = vadd.f32 %v1495, %v1676
        %v1696 = vadd.f32 %v1500, %v1676
        %v1697 = vadd.f32 %v1503, %v1676
        %v1698 = vadd.f32 %v1547, %v1676
        %v1699 = vadd.f32 %v1550, %v1676
        %v1700 = vadd.f32 %v1555, %v1676
        %v1701 = vadd.f32 %v1558, %v1676
        %v1702 = vadd.f32 %v1602, %v1676
        %v1703 = vadd.f32 %v1605, %v1676
        %v1704 = vadd.f32 %v1610, %v1676
        %v1705 = vadd.f32 %v1613, %v1676
        %v1706 = vadd.f32 %v1657, %v1676
        %v1707 = vadd.f32 %v1660, %v1676
        %v1708 = vadd.f32 %v1665, %v1676
        %v1709 = vadd.f32 %v1668, %v1676
        %v1710 = vmax.f32 %v1678, 0.0
        %v1711 = vmax.f32 %v1679, 0.0
        %v1712 = vmax.f32 %v1680, 0.0
        %v1713 = vmax.f32 %v1681, 0.0
        %v1714 = vmax.f32 %v1682, 0.0
        %v1715 = vmax.f32 %v1683, 0.0
        %v1716 = vmax.f32 %v1684, 0.0
        %v1717 = vmax.f32 %v1685, 0.0
        %v1718 = vmax.f32 %v1686, 0.0
        %v1719 = vmax.f32 %v1687, 0.0
        %v1720 = vmax.f32 %v1688, 0.0
        %v1721 = vmax.f32 %v1689, 0.0
        %v1722 = vmax.f32 %v1690, 0.0
        %v1723 = vmax.f32 %v1691, 0.0
        %v1724 = vmax.f32 %v1692, 0.0
        %v1725 = vmax.f32 %v1693, 0.0
        %v1726 = vmax.f32 %v1694, 0.0
        %v1727 = vmax.f32 %v1695, 0.0
        %v1728 = vmax.f32 %v1696, 0.0
        %v1729 = vmax.f32 %v1697, 0.0
        %v1730 = vmax.f32 %v1698, 0.0
        %v1731 = vmax.f32 %v1699, 0.0
        %v1732 = vmax.f32 %v1700, 0.0
        %v1733 = vmax.f32 %v1701, 0.0
        %v1734 = vmax.f32 %v1702, 0.0
        %v1735 = vmax.f32 %v1703, 0.0
        %v1736 = vmax.f32 %v1704, 0.0
        %v1737 = vmax.f32 %v1705, 0.0
        %v1738 = vmax.f32 %v1706, 0.0
        %v1739 = vmax.f32 %v1707, 0.0
        %v1740 = vmax.f32 %v1708, 0.0
        %v1741 = vmax.f32 %v1709, 0.0
        %v1742 = vpack.c.bf16 %v1711, %v1710
        %v1743 = vpack.c.bf16 %v1713, %v1712
        %v1744 = vpack.c.bf16 %v1715, %v1714
        %v1745 = vpack.c.bf16 %v1717, %v1716
        %v1746 = vpack.c.bf16 %v1719, %v1718
        %v1747 = vpack.c.bf16 %v1721, %v1720
        %v1748 = vpack.c.bf16 %v1723, %v1722
        %v1749 = vpack.c.bf16 %v1725, %v1724
        %v1750 = vpack.c.bf16 %v1727, %v1726
        %v1751 = vpack.c.bf16 %v1729, %v1728
        %v1752 = vpack.c.bf16 %v1731, %v1730
        %v1753 = vpack.c.bf16 %v1733, %v1732
        %v1754 = vpack.c.bf16 %v1735, %v1734
        %v1755 = vpack.c.bf16 %v1737, %v1736
        %v1756 = vpack.c.bf16 %v1739, %v1738
        %v1757 = vpack.c.bf16 %v1741, %v1740
        %v1758 = vld [vmem:[#allocation10] sm:$0xf]
        %v1759 = vld [vmem:[#allocation10 + $0x4] sm:$0xf]
        %v1760 = vld [vmem:[#allocation10 + $0x8] sm:$0xf]
        %v1761 = vld [vmem:[#allocation10 + $0xc] sm:$0xf]
        %v1762 = vld [vmem:[#allocation10 + $0x10] sm:$0xf]
        %v1763 = vld [vmem:[#allocation10 + $0x14] sm:$0xf]
        %v1764 = vld [vmem:[#allocation10 + $0x18] sm:$0xf]
        %v1765 = vld [vmem:[#allocation10 + $0x1c] sm:$0xf]
        %v1766 = vld [vmem:[#allocation10 + $0x20] sm:$0xf]
        %v1767 = vld [vmem:[#allocation10 + $0x24] sm:$0xf]
        %v1768 = vld [vmem:[#allocation10 + $0x28] sm:$0xf]
        %v1769 = vld [vmem:[#allocation10 + $0x2c] sm:$0xf]
        %v1770 = vld [vmem:[#allocation10 + $0x30] sm:$0xf]
        %v1771 = vld [vmem:[#allocation10 + $0x34] sm:$0xf]
        %v1772 = vld [vmem:[#allocation10 + $0x38] sm:$0xf]
        %v1773 = vld [vmem:[#allocation10 + $0x3c] sm:$0xf]
        %v1790 = vunpack.c.l.b16 %v1758
        %v1791 = vunpack.c.l.b16 %v1759
        %v1792 = vunpack.c.l.b16 %v1760
        %v1793 = vunpack.c.l.b16 %v1761
        %v1794 = vunpack.c.l.b16 %v1762
        %v1795 = vunpack.c.l.b16 %v1763
        %v1796 = vunpack.c.l.b16 %v1764
        %v1797 = vunpack.c.l.b16 %v1765
        %v1798 = vunpack.c.l.b16 %v1766
        %v1799 = vunpack.c.l.b16 %v1767
        %v1800 = vunpack.c.l.b16 %v1768
        %v1801 = vunpack.c.l.b16 %v1769
        %v1802 = vunpack.c.l.b16 %v1770
        %v1803 = vunpack.c.l.b16 %v1771
        %v1804 = vunpack.c.l.b16 %v1772
        %v1805 = vunpack.c.l.b16 %v1773
        %v1806 = vpack.c.b16 %v1791, %v1790
        %v1807 = vpack.c.b16 %v1793, %v1792
        %v1808 = vpack.c.b16 %v1795, %v1794
        %v1809 = vpack.c.b16 %v1797, %v1796
        %v1810 = vpack.c.b16 %v1799, %v1798
        %v1811 = vpack.c.b16 %v1801, %v1800
        %v1812 = vpack.c.b16 %v1803, %v1802
        %v1813 = vpack.c.b16 %v1805, %v1804
        %1822 = vmatprep.subr.bf16.mxu0 0
        %1823 = vmatpush1.bf16.msra.mxu0 %v1806
        %1824 = vmatprep.subr.bf16.mxu0 0
        %1825 = vmatpush1.bf16.msra.mxu0 %v1807
        %1826 = vmatprep.subr.bf16.mxu0 0
        %1827 = vmatpush1.bf16.msra.mxu0 %v1808
        %1828 = vmatprep.subr.bf16.mxu0 0
        %1829 = vmatpush1.bf16.msra.mxu0 %v1809
        %1830 = vmatprep.subr.bf16.mxu0 0
        %1831 = vmatpush1.bf16.msra.mxu0 %v1810
        %1832 = vmatprep.subr.bf16.mxu0 0
        %1833 = vmatpush1.bf16.msra.mxu0 %v1811
        %1834 = vmatprep.subr.bf16.mxu0 0
        %1835 = vmatpush1.bf16.msra.mxu0 %v1812
        %1836 = vmatprep.subr.bf16.mxu0 0
        %1837 = vmatpush1.bf16.msra.mxu0 %v1813
        %1838 = vmatprep.subr.bf16.mxu0 0
        %1839 = vmatpush1.bf16.msra.mxu0 0
        %1840 = vmatprep.subr.bf16.mxu0 0
        %1841 = vmatpush1.bf16.msra.mxu0 0
        %1842 = vmatprep.subr.bf16.mxu0 0
        %1843 = vmatpush1.bf16.msra.mxu0 0
        %1844 = vmatprep.subr.bf16.mxu0 0
        %1845 = vmatpush1.bf16.msra.mxu0 0
        %1846 = vmatprep.subr.bf16.mxu0 0
        %1847 = vmatpush1.bf16.msra.mxu0 0
        %1848 = vmatprep.subr.bf16.mxu0 0
        %1849 = vmatpush1.bf16.msra.mxu0 0
        %1850 = vmatprep.subr.bf16.mxu0 0
        %1851 = vmatpush1.bf16.msra.mxu0 0
        %1852 = vmatprep.subr.bf16.mxu0 0
        %1853 = vmatpush1.bf16.msra.mxu0 0
        %1854 = vmatprep.mubr.bf16.mxu0 0
        %1855 = vmatmul.mubr.bf16.gmra.mrb[0].mxu0 %v1742
        %v1856 = vpop.f32.mrb[0].mxu0
        %v1857 = vadd.f32 0.0, %v1856
        %v1858 = vpop.f32.mrb[0].mxu0
        %v1859 = vpop.f32.mrb[0].mxu0
        %v1860 = vadd.f32 0.0, %v1859
        %v1861 = vpop.f32.mrb[0].mxu0
        %1862 = vmatprep.mubr.bf16.mxu0 0
        %1863 = vmatmul.mubr.bf16.gmra.mrb[0].mxu0 %v1743
        %v1864 = vpop.f32.mrb[0].mxu0
        %v1865 = vadd.f32 0.0, %v1864
        %v1866 = vpop.f32.mrb[0].mxu0
        %v1867 = vpop.f32.mrb[0].mxu0
        %v1868 = vadd.f32 0.0, %v1867
        %v1869 = vpop.f32.mrb[0].mxu0
        %1870 = vmatprep.mubr.bf16.mxu0 0
        %1871 = vmatmul.mubr.bf16.gmra.mrb[0].mxu0 %v1744
        %v1872 = vpop.f32.mrb[0].mxu0
        %v1873 = vadd.f32 0.0, %v1872
        %v1874 = vpop.f32.mrb[0].mxu0
        %v1875 = vpop.f32.mrb[0].mxu0
        %v1876 = vadd.f32 0.0, %v1875
        %v1877 = vpop.f32.mrb[0].mxu0
        %1878 = vmatprep.mubr.bf16.mxu0 0
        %1879 = vmatmul.mubr.bf16.gmra.mrb[0].mxu0 %v1745
        %v1880 = vpop.f32.mrb[0].mxu0
        %v1881 = vadd.f32 0.0, %v1880
        %v1882 = vpop.f32.mrb[0].mxu0
        %v1883 = vpop.f32.mrb[0].mxu0
        %v1884 = vadd.f32 0.0, %v1883
        %v1885 = vpop.f32.mrb[0].mxu0
        %1886 = vmatprep.mubr.bf16.mxu0 0
        %1887 = vmatmul.mubr.bf16.gmra.mrb[0].mxu0 %v1746
        %v1888 = vpop.f32.mrb[0].mxu0
        %v1889 = vadd.f32 0.0, %v1888
        %v1890 = vpop.f32.mrb[0].mxu0
        %v1891 = vpop.f32.mrb[0].mxu0
        %v1892 = vadd.f32 0.0, %v1891
        %v1893 = vpop.f32.mrb[0].mxu0
        %1894 = vmatprep.mubr.bf16.mxu0 0
        %1895 = vmatmul.mubr.bf16.gmra.mrb[0].mxu0 %v1747
        %v1896 = vpop.f32.mrb[0].mxu0
        %v1897 = vadd.f32 0.0, %v1896
        %v1898 = vpop.f32.mrb[0].mxu0
        %v1899 = vpop.f32.mrb[0].mxu0
        %v1900 = vadd.f32 0.0, %v1899
        %v1901 = vpop.f32.mrb[0].mxu0
        %1902 = vmatprep.mubr.bf16.mxu0 0
        %1903 = vmatmul.mubr.bf16.gmra.mrb[0].mxu0 %v1748
        %v1904 = vpop.f32.mrb[0].mxu0
        %v1905 = vadd.f32 0.0, %v1904
        %v1906 = vpop.f32.mrb[0].mxu0
        %v1907 = vpop.f32.mrb[0].mxu0
        %v1908 = vadd.f32 0.0, %v1907
        %v1909 = vpop.f32.mrb[0].mxu0
        %1910 = vmatprep.mubr.bf16.mxu0 0
        %1911 = vmatmul.mubr.bf16.gmra.mrb[0].mxu0 %v1749
        %v1912 = vpop.f32.mrb[0].mxu0
        %v1913 = vadd.f32 0.0, %v1912
        %v1914 = vpop.f32.mrb[0].mxu0
        %v1915 = vpop.f32.mrb[0].mxu0
        %v1916 = vadd.f32 0.0, %v1915
        %v1917 = vpop.f32.mrb[0].mxu0
        %1918 = vmatprep.mubr.bf16.mxu0 0
        %1919 = vmatmul.mubr.bf16.gmra.mrb[0].mxu0 %v1750
        %v1920 = vpop.f32.mrb[0].mxu0
        %v1921 = vadd.f32 0.0, %v1920
        %v1922 = vpop.f32.mrb[0].mxu0
        %v1923 = vpop.f32.mrb[0].mxu0
        %v1924 = vadd.f32 0.0, %v1923
        %v1925 = vpop.f32.mrb[0].mxu0
        %1926 = vmatprep.mubr.bf16.mxu0 0
        %1927 = vmatmul.mubr.bf16.gmra.mrb[0].mxu0 %v1751
        %v1928 = vpop.f32.mrb[0].mxu0
        %v1929 = vadd.f32 0.0, %v1928
        %v1930 = vpop.f32.mrb[0].mxu0
        %v1931 = vpop.f32.mrb[0].mxu0
        %v1932 = vadd.f32 0.0, %v1931
        %v1933 = vpop.f32.mrb[0].mxu0
        %1934 = vmatprep.mubr.bf16.mxu0 0
        %1935 = vmatmul.mubr.bf16.gmra.mrb[0].mxu0 %v1752
        %v1936 = vpop.f32.mrb[0].mxu0
        %v1937 = vadd.f32 0.0, %v1936
        %v1938 = vpop.f32.mrb[0].mxu0
        %v1939 = vpop.f32.mrb[0].mxu0
        %v1940 = vadd.f32 0.0, %v1939
        %v1941 = vpop.f32.mrb[0].mxu0
        %1942 = vmatprep.mubr.bf16.mxu0 0
        %1943 = vmatmul.mubr.bf16.gmra.mrb[0].mxu0 %v1753
        %v1944 = vpop.f32.mrb[0].mxu0
        %v1945 = vadd.f32 0.0, %v1944
        %v1946 = vpop.f32.mrb[0].mxu0
        %v1947 = vpop.f32.mrb[0].mxu0
        %v1948 = vadd.f32 0.0, %v1947
        %v1949 = vpop.f32.mrb[0].mxu0
        %1950 = vmatprep.mubr.bf16.mxu0 0
        %1951 = vmatmul.mubr.bf16.gmra.mrb[0].mxu0 %v1754
        %v1952 = vpop.f32.mrb[0].mxu0
        %v1953 = vadd.f32 0.0, %v1952
        %v1954 = vpop.f32.mrb[0].mxu0
        %v1955 = vpop.f32.mrb[0].mxu0
        %v1956 = vadd.f32 0.0, %v1955
        %v1957 = vpop.f32.mrb[0].mxu0
        %1958 = vmatprep.mubr.bf16.mxu0 0
        %1959 = vmatmul.mubr.bf16.gmra.mrb[0].mxu0 %v1755
        %v1960 = vpop.f32.mrb[0].mxu0
        %v1961 = vadd.f32 0.0, %v1960
        %v1962 = vpop.f32.mrb[0].mxu0
        %v1963 = vpop.f32.mrb[0].mxu0
        %v1964 = vadd.f32 0.0, %v1963
        %v1965 = vpop.f32.mrb[0].mxu0
        %1966 = vmatprep.mubr.bf16.mxu0 0
        %1967 = vmatmul.mubr.bf16.gmra.mrb[0].mxu0 %v1756
        %v1968 = vpop.f32.mrb[0].mxu0
        %v1969 = vadd.f32 0.0, %v1968
        %v1970 = vpop.f32.mrb[0].mxu0
        %v1971 = vpop.f32.mrb[0].mxu0
        %v1972 = vadd.f32 0.0, %v1971
        %v1973 = vpop.f32.mrb[0].mxu0
        %1974 = vmatprep.mubr.bf16.mxu0 0
        %1975 = vmatmul.mubr.bf16.gmra.mrb[0].mxu0 %v1757
        %v1976 = vpop.f32.mrb[0].mxu0
        %v1977 = vadd.f32 0.0, %v1976
        %v1978 = vpop.f32.mrb[0].mxu0
        %v1979 = vpop.f32.mrb[0].mxu0
        %v1980 = vadd.f32 0.0, %v1979
        %v1981 = vpop.f32.mrb[0].mxu0
        %1982 = vdwg.mxu0
        %v1983 = vpack.c.bf16 %v1860, %v1857
        %v1984 = vpack.c.bf16 %v1868, %v1865
        %v1985 = vpack.c.bf16 %v1876, %v1873
        %v1986 = vpack.c.bf16 %v1884, %v1881
        %v1987 = vpack.c.bf16 %v1892, %v1889
        %v1988 = vpack.c.bf16 %v1900, %v1897
        %v1989 = vpack.c.bf16 %v1908, %v1905
        %v1990 = vpack.c.bf16 %v1916, %v1913
        %v1991 = vpack.c.bf16 %v1924, %v1921
        %v1992 = vpack.c.bf16 %v1932, %v1929
        %v1993 = vpack.c.bf16 %v1940, %v1937
        %v1994 = vpack.c.bf16 %v1948, %v1945
        %v1995 = vpack.c.bf16 %v1956, %v1953
        %v1996 = vpack.c.bf16 %v1964, %v1961
        %v1997 = vpack.c.bf16 %v1972, %v1969
        %v1998 = vpack.c.bf16 %v1980, %v1977
        %v1999 = vmul.f32 %v781, %v1857
        %v2000 = vmul.f32 %v782, %v1860
        %v2001 = vmul.f32 %v783, %v1865
        %v2002 = vmul.f32 %v784, %v1868
        %v2003 = vmul.f32 %v785, %v1873
        %v2004 = vmul.f32 %v786, %v1876
        %v2005 = vmul.f32 %v787, %v1881
        %v2006 = vmul.f32 %v788, %v1884
        %v2007 = vmul.f32 %v789, %v1889
        %v2008 = vmul.f32 %v790, %v1892
        %v2009 = vmul.f32 %v791, %v1897
        %v2010 = vmul.f32 %v792, %v1900
        %v2011 = vmul.f32 %v793, %v1905
        %v2012 = vmul.f32 %v794, %v1908
        %v2013 = vmul.f32 %v795, %v1913
        %v2014 = vmul.f32 %v796, %v1916
        %v2015 = vmul.f32 %v797, %v1921
        %v2016 = vmul.f32 %v798, %v1924
        %v2017 = vmul.f32 %v799, %v1929
        %v2018 = vmul.f32 %v800, %v1932
        %v2019 = vmul.f32 %v801, %v1937
        %v2020 = vmul.f32 %v802, %v1940
        %v2021 = vmul.f32 %v803, %v1945
        %v2022 = vmul.f32 %v804, %v1948
        %v2023 = vmul.f32 %v805, %v1953
        %v2024 = vmul.f32 %v806, %v1956
        %v2025 = vmul.f32 %v807, %v1961
        %v2026 = vmul.f32 %v808, %v1964
        %v2027 = vmul.f32 %v809, %v1969
        %v2028 = vmul.f32 %v810, %v1972
        %v2029 = vmul.f32 %v811, %v1977
        %v2030 = vmul.f32 %v812, %v1980
        %2031 = vmatprep.subr.bf16.mxu0 0
        %2032 = vmatpush1.bf16.msra.mxu0 %v1983
        %2033 = vmatprep.subr.bf16.mxu0 0
        %2034 = vmatpush1.bf16.msra.mxu0 %v1984
        %2035 = vmatprep.subr.bf16.mxu0 0
        %2036 = vmatpush1.bf16.msra.mxu0 0
        %2037 = vmatprep.subr.bf16.mxu0 0
        %2038 = vmatpush1.bf16.msra.mxu0 0
        %2039 = vmatprep.subr.bf16.mxu0 0
        %2040 = vmatpush1.bf16.msra.mxu0 0
        %2041 = vmatprep.subr.bf16.mxu0 0
        %2042 = vmatpush1.bf16.msra.mxu0 0
        %2043 = vmatprep.subr.bf16.mxu0 0
        %2044 = vmatpush1.bf16.msra.mxu0 0
        %2045 = vmatprep.subr.bf16.mxu0 0
        %2046 = vmatpush1.bf16.msra.mxu0 0
        %2047 = vmatprep.subr.bf16.mxu0 0
        %2048 = vmatpush1.bf16.msra.mxu0 0
        %2049 = vmatprep.subr.bf16.mxu0 0
        %2050 = vmatpush1.bf16.msra.mxu0 0
        %2051 = vmatprep.subr.bf16.mxu0 0
        %2052 = vmatpush1.bf16.msra.mxu0 0
        %2053 = vmatprep.subr.bf16.mxu0 0
        %2054 = vmatpush1.bf16.msra.mxu0 0
        %2055 = vmatprep.subr.bf16.mxu0 0
        %2056 = vmatpush1.bf16.msra.mxu0 0
        %2057 = vmatprep.subr.bf16.mxu0 0
        %2058 = vmatpush1.bf16.msra.mxu0 0
        %2059 = vmatprep.subr.bf16.mxu0 0
        %2060 = vmatpush1.bf16.msra.mxu0 0
        %2061 = vmatprep.subr.bf16.mxu0 0
        %2062 = vmatpush1.bf16.msra.mxu0 0
        %2063 = vmatprep.mubr.bf16.mxu0 0
        %2064 = vmatmul.mubr.bf16.gmra.mrb[0].mxu0 %v1232
        %v2065 = vpop.f32.mrb[0].mxu0
        %v2066 = vadd.f32 %v1999, %v2065
        %v2067 = vpop.f32.mrb[0].mxu0
        %v2068 = vpop.f32.mrb[0].mxu0
        %v2069 = vadd.f32 %v2000, %v2068
        %v2070 = vpop.f32.mrb[0].mxu0
        %2071 = vmatprep.mubr.bf16.mxu0 0
        %2072 = vmatmul.mubr.bf16.gmra.mrb[0].mxu0 %v1235
        %v2073 = vpop.f32.mrb[0].mxu0
        %v2074 = vadd.f32 %v2001, %v2073
        %v2075 = vpop.f32.mrb[0].mxu0
        %v2076 = vpop.f32.mrb[0].mxu0
        %v2077 = vadd.f32 %v2002, %v2076
        %v2078 = vpop.f32.mrb[0].mxu0
        %2079 = vdwg.mxu0
        %2080 = vmatprep.subr.bf16.mxu0 0
        %2081 = vmatpush1.bf16.msra.mxu0 %v1985
        %2082 = vmatprep.subr.bf16.mxu0 0
        %2083 = vmatpush1.bf16.msra.mxu0 %v1986
        %2084 = vmatprep.subr.bf16.mxu0 0
        %2085 = vmatpush1.bf16.msra.mxu0 0
        %2086 = vmatprep.subr.bf16.mxu0 0
        %2087 = vmatpush1.bf16.msra.mxu0 0
        %2088 = vmatprep.subr.bf16.mxu0 0
        %2089 = vmatpush1.bf16.msra.mxu0 0
        %2090 = vmatprep.subr.bf16.mxu0 0
        %2091 = vmatpush1.bf16.msra.mxu0 0
        %2092 = vmatprep.subr.bf16.mxu0 0
        %2093 = vmatpush1.bf16.msra.mxu0 0
        %2094 = vmatprep.subr.bf16.mxu0 0
        %2095 = vmatpush1.bf16.msra.mxu0 0
        %2096 = vmatprep.subr.bf16.mxu0 0
        %2097 = vmatpush1.bf16.msra.mxu0 0
        %2098 = vmatprep.subr.bf16.mxu0 0
        %2099 = vmatpush1.bf16.msra.mxu0 0
        %2100 = vmatprep.subr.bf16.mxu0 0
        %2101 = vmatpush1.bf16.msra.mxu0 0
        %2102 = vmatprep.subr.bf16.mxu0 0
        %2103 = vmatpush1.bf16.msra.mxu0 0
        %2104 = vmatprep.subr.bf16.mxu0 0
        %2105 = vmatpush1.bf16.msra.mxu0 0
        %2106 = vmatprep.subr.bf16.mxu0 0
        %2107 = vmatpush1.bf16.msra.mxu0 0
        %2108 = vmatprep.subr.bf16.mxu0 0
        %2109 = vmatpush1.bf16.msra.mxu0 0
        %2110 = vmatprep.subr.bf16.mxu0 0
        %2111 = vmatpush1.bf16.msra.mxu0 0
        %2112 = vmatprep.mubr.bf16.mxu0 0
        %2113 = vmatmul.mubr.bf16.gmra.mrb[0].mxu0 %v1287
        %v2114 = vpop.f32.mrb[0].mxu0
        %v2115 = vadd.f32 %v2003, %v2114
        %v2116 = vpop.f32.mrb[0].mxu0
        %v2117 = vpop.f32.mrb[0].mxu0
        %v2118 = vadd.f32 %v2004, %v2117
        %v2119 = vpop.f32.mrb[0].mxu0
        %2120 = vmatprep.mubr.bf16.mxu0 0
        %2121 = vmatmul.mubr.bf16.gmra.mrb[0].mxu0 %v1290
        %v2122 = vpop.f32.mrb[0].mxu0
        %v2123 = vadd.f32 %v2005, %v2122
        %v2124 = vpop.f32.mrb[0].mxu0
        %v2125 = vpop.f32.mrb[0].mxu0
        %v2126 = vadd.f32 %v2006, %v2125
        %v2127 = vpop.f32.mrb[0].mxu0
        %2128 = vdwg.mxu0
        %2129 = vmatprep.subr.bf16.mxu0 0
        %2130 = vmatpush1.bf16.msra.mxu0 %v1987
        %2131 = vmatprep.subr.bf16.mxu0 0
        %2132 = vmatpush1.bf16.msra.mxu0 %v1988
        %2133 = vmatprep.subr.bf16.mxu0 0
        %2134 = vmatpush1.bf16.msra.mxu0 0
        %2135 = vmatprep.subr.bf16.mxu0 0
        %2136 = vmatpush1.bf16.msra.mxu0 0
        %2137 = vmatprep.subr.bf16.mxu0 0
        %2138 = vmatpush1.bf16.msra.mxu0 0
        %2139 = vmatprep.subr.bf16.mxu0 0
        %2140 = vmatpush1.bf16.msra.mxu0 0
        %2141 = vmatprep.subr.bf16.mxu0 0
        %2142 = vmatpush1.bf16.msra.mxu0 0
        %2143 = vmatprep.subr.bf16.mxu0 0
        %2144 = vmatpush1.bf16.msra.mxu0 0
        %2145 = vmatprep.subr.bf16.mxu0 0
        %2146 = vmatpush1.bf16.msra.mxu0 0
        %2147 = vmatprep.subr.bf16.mxu0 0
        %2148 = vmatpush1.bf16.msra.mxu0 0
        %2149 = vmatprep.subr.bf16.mxu0 0
        %2150 = vmatpush1.bf16.msra.mxu0 0
        %2151 = vmatprep.subr.bf16.mxu0 0
        %2152 = vmatpush1.bf16.msra.mxu0 0
        %2153 = vmatprep.subr.bf16.mxu0 0
        %2154 = vmatpush1.bf16.msra.mxu0 0
        %2155 = vmatprep.subr.bf16.mxu0 0
        %2156 = vmatpush1.bf16.msra.mxu0 0
        %2157 = vmatprep.subr.bf16.mxu0 0
        %2158 = vmatpush1.bf16.msra.mxu0 0
        %2159 = vmatprep.subr.bf16.mxu0 0
        %2160 = vmatpush1.bf16.msra.mxu0 0
        %2161 = vmatprep.mubr.bf16.mxu0 0
        %2162 = vmatmul.mubr.bf16.gmra.mrb[0].mxu0 %v1342
        %v2163 = vpop.f32.mrb[0].mxu0
        %v2164 = vadd.f32 %v2007, %v2163
        %v2165 = vpop.f32.mrb[0].mxu0
        %v2166 = vpop.f32.mrb[0].mxu0
        %v2167 = vadd.f32 %v2008, %v2166
        %v2168 = vpop.f32.mrb[0].mxu0
        %2169 = vmatprep.mubr.bf16.mxu0 0
        %2170 = vmatmul.mubr.bf16.gmra.mrb[0].mxu0 %v1345
        %v2171 = vpop.f32.mrb[0].mxu0
        %v2172 = vadd.f32 %v2009, %v2171
        %v2173 = vpop.f32.mrb[0].mxu0
        %v2174 = vpop.f32.mrb[0].mxu0
        %v2175 = vadd.f32 %v2010, %v2174
        %v2176 = vpop.f32.mrb[0].mxu0
        %2177 = vdwg.mxu0
        %2178 = vmatprep.subr.bf16.mxu0 0
        %2179 = vmatpush1.bf16.msra.mxu0 %v1989
        %2180 = vmatprep.subr.bf16.mxu0 0
        %2181 = vmatpush1.bf16.msra.mxu0 %v1990
        %2182 = vmatprep.subr.bf16.mxu0 0
        %2183 = vmatpush1.bf16.msra.mxu0 0
        %2184 = vmatprep.subr.bf16.mxu0 0
        %2185 = vmatpush1.bf16.msra.mxu0 0
        %2186 = vmatprep.subr.bf16.mxu0 0
        %2187 = vmatpush1.bf16.msra.mxu0 0
        %2188 = vmatprep.subr.bf16.mxu0 0
        %2189 = vmatpush1.bf16.msra.mxu0 0
        %2190 = vmatprep.subr.bf16.mxu0 0
        %2191 = vmatpush1.bf16.msra.mxu0 0
        %2192 = vmatprep.subr.bf16.mxu0 0
        %2193 = vmatpush1.bf16.msra.mxu0 0
        %2194 = vmatprep.subr.bf16.mxu0 0
        %2195 = vmatpush1.bf16.msra.mxu0 0
        %2196 = vmatprep.subr.bf16.mxu0 0
        %2197 = vmatpush1.bf16.msra.mxu0 0
        %2198 = vmatprep.subr.bf16.mxu0 0
        %2199 = vmatpush1.bf16.msra.mxu0 0
        %2200 = vmatprep.subr.bf16.mxu0 0
        %2201 = vmatpush1.bf16.msra.mxu0 0
        %2202 = vmatprep.subr.bf16.mxu0 0
        %2203 = vmatpush1.bf16.msra.mxu0 0
        %2204 = vmatprep.subr.bf16.mxu0 0
        %2205 = vmatpush1.bf16.msra.mxu0 0
        %2206 = vmatprep.subr.bf16.mxu0 0
        %2207 = vmatpush1.bf16.msra.mxu0 0
        %2208 = vmatprep.subr.bf16.mxu0 0
        %2209 = vmatpush1.bf16.msra.mxu0 0
        %2210 = vmatprep.mubr.bf16.mxu0 0
        %2211 = vmatmul.mubr.bf16.gmra.mrb[0].mxu0 %v1397
        %v2212 = vpop.f32.mrb[0].mxu0
        %v2213 = vadd.f32 %v2011, %v2212
        %v2214 = vpop.f32.mrb[0].mxu0
        %v2215 = vpop.f32.mrb[0].mxu0
        %v2216 = vadd.f32 %v2012, %v2215
        %v2217 = vpop.f32.mrb[0].mxu0
        %2218 = vmatprep.mubr.bf16.mxu0 0
        %2219 = vmatmul.mubr.bf16.gmra.mrb[0].mxu0 %v1400
        %v2220 = vpop.f32.mrb[0].mxu0
        %v2221 = vadd.f32 %v2013, %v2220
        %v2222 = vpop.f32.mrb[0].mxu0
        %v2223 = vpop.f32.mrb[0].mxu0
        %v2224 = vadd.f32 %v2014, %v2223
        %v2225 = vpop.f32.mrb[0].mxu0
        %2226 = vdwg.mxu0
        %2227 = vmatprep.subr.bf16.mxu0 0
        %2228 = vmatpush1.bf16.msra.mxu0 %v1991
        %2229 = vmatprep.subr.bf16.mxu0 0
        %2230 = vmatpush1.bf16.msra.mxu0 %v1992
        %2231 = vmatprep.subr.bf16.mxu0 0
        %2232 = vmatpush1.bf16.msra.mxu0 0
        %2233 = vmatprep.subr.bf16.mxu0 0
        %2234 = vmatpush1.bf16.msra.mxu0 0
        %2235 = vmatprep.subr.bf16.mxu0 0
        %2236 = vmatpush1.bf16.msra.mxu0 0
        %2237 = vmatprep.subr.bf16.mxu0 0
        %2238 = vmatpush1.bf16.msra.mxu0 0
        %2239 = vmatprep.subr.bf16.mxu0 0
        %2240 = vmatpush1.bf16.msra.mxu0 0
        %2241 = vmatprep.subr.bf16.mxu0 0
        %2242 = vmatpush1.bf16.msra.mxu0 0
        %2243 = vmatprep.subr.bf16.mxu0 0
        %2244 = vmatpush1.bf16.msra.mxu0 0
        %2245 = vmatprep.subr.bf16.mxu0 0
        %2246 = vmatpush1.bf16.msra.mxu0 0
        %2247 = vmatprep.subr.bf16.mxu0 0
        %2248 = vmatpush1.bf16.msra.mxu0 0
        %2249 = vmatprep.subr.bf16.mxu0 0
        %2250 = vmatpush1.bf16.msra.mxu0 0
        %2251 = vmatprep.subr.bf16.mxu0 0
        %2252 = vmatpush1.bf16.msra.mxu0 0
        %2253 = vmatprep.subr.bf16.mxu0 0
        %2254 = vmatpush1.bf16.msra.mxu0 0
        %2255 = vmatprep.subr.bf16.mxu0 0
        %2256 = vmatpush1.bf16.msra.mxu0 0
        %2257 = vmatprep.subr.bf16.mxu0 0
        %2258 = vmatpush1.bf16.msra.mxu0 0
        %2259 = vmatprep.mubr.bf16.mxu0 0
        %2260 = vmatmul.mubr.bf16.gmra.mrb[0].mxu0 %v1452
        %v2261 = vpop.f32.mrb[0].mxu0
        %v2262 = vadd.f32 %v2015, %v2261
        %v2263 = vpop.f32.mrb[0].mxu0
        %v2264 = vpop.f32.mrb[0].mxu0
        %v2265 = vadd.f32 %v2016, %v2264
        %v2266 = vpop.f32.mrb[0].mxu0
        %2267 = vmatprep.mubr.bf16.mxu0 0
        %2268 = vmatmul.mubr.bf16.gmra.mrb[0].mxu0 %v1455
        %v2269 = vpop.f32.mrb[0].mxu0
        %v2270 = vadd.f32 %v2017, %v2269
        %v2271 = vpop.f32.mrb[0].mxu0
        %v2272 = vpop.f32.mrb[0].mxu0
        %v2273 = vadd.f32 %v2018, %v2272
        %v2274 = vpop.f32.mrb[0].mxu0
        %2275 = vdwg.mxu0
        %2276 = vmatprep.subr.bf16.mxu0 0
        %2277 = vmatpush1.bf16.msra.mxu0 %v1993
        %2278 = vmatprep.subr.bf16.mxu0 0
        %2279 = vmatpush1.bf16.msra.mxu0 %v1994
        %2280 = vmatprep.subr.bf16.mxu0 0
        %2281 = vmatpush1.bf16.msra.mxu0 0
        %2282 = vmatprep.subr.bf16.mxu0 0
        %2283 = vmatpush1.bf16.msra.mxu0 0
        %2284 = vmatprep.subr.bf16.mxu0 0
        %2285 = vmatpush1.bf16.msra.mxu0 0
        %2286 = vmatprep.subr.bf16.mxu0 0
        %2287 = vmatpush1.bf16.msra.mxu0 0
        %2288 = vmatprep.subr.bf16.mxu0 0
        %2289 = vmatpush1.bf16.msra.mxu0 0
        %2290 = vmatprep.subr.bf16.mxu0 0
        %2291 = vmatpush1.bf16.msra.mxu0 0
        %2292 = vmatprep.subr.bf16.mxu0 0
        %2293 = vmatpush1.bf16.msra.mxu0 0
        %2294 = vmatprep.subr.bf16.mxu0 0
        %2295 = vmatpush1.bf16.msra.mxu0 0
        %2296 = vmatprep.subr.bf16.mxu0 0
        %2297 = vmatpush1.bf16.msra.mxu0 0
        %2298 = vmatprep.subr.bf16.mxu0 0
        %2299 = vmatpush1.bf16.msra.mxu0 0
        %2300 = vmatprep.subr.bf16.mxu0 0
        %2301 = vmatpush1.bf16.msra.mxu0 0
        %2302 = vmatprep.subr.bf16.mxu0 0
        %2303 = vmatpush1.bf16.msra.mxu0 0
        %2304 = vmatprep.subr.bf16.mxu0 0
        %2305 = vmatpush1.bf16.msra.mxu0 0
        %2306 = vmatprep.subr.bf16.mxu0 0
        %2307 = vmatpush1.bf16.msra.mxu0 0
        %2308 = vmatprep.mubr.bf16.mxu0 0
        %2309 = vmatmul.mubr.bf16.gmra.mrb[0].mxu0 %v1507
        %v2310 = vpop.f32.mrb[0].mxu0
        %v2311 = vadd.f32 %v2019, %v2310
        %v2312 = vpop.f32.mrb[0].mxu0
        %v2313 = vpop.f32.mrb[0].mxu0
        %v2314 = vadd.f32 %v2020, %v2313
        %v2315 = vpop.f32.mrb[0].mxu0
        %2316 = vmatprep.mubr.bf16.mxu0 0
        %2317 = vmatmul.mubr.bf16.gmra.mrb[0].mxu0 %v1510
        %v2318 = vpop.f32.mrb[0].mxu0
        %v2319 = vadd.f32 %v2021, %v2318
        %v2320 = vpop.f32.mrb[0].mxu0
        %v2321 = vpop.f32.mrb[0].mxu0
        %v2322 = vadd.f32 %v2022, %v2321
        %v2323 = vpop.f32.mrb[0].mxu0
        %2324 = vdwg.mxu0
        %2325 = vmatprep.subr.bf16.mxu0 0
        %2326 = vmatpush1.bf16.msra.mxu0 %v1995
        %2327 = vmatprep.subr.bf16.mxu0 0
        %2328 = vmatpush1.bf16.msra.mxu0 %v1996
        %2329 = vmatprep.subr.bf16.mxu0 0
        %2330 = vmatpush1.bf16.msra.mxu0 0
        %2331 = vmatprep.subr.bf16.mxu0 0
        %2332 = vmatpush1.bf16.msra.mxu0 0
        %2333 = vmatprep.subr.bf16.mxu0 0
        %2334 = vmatpush1.bf16.msra.mxu0 0
        %2335 = vmatprep.subr.bf16.mxu0 0
        %2336 = vmatpush1.bf16.msra.mxu0 0
        %2337 = vmatprep.subr.bf16.mxu0 0
        %2338 = vmatpush1.bf16.msra.mxu0 0
        %2339 = vmatprep.subr.bf16.mxu0 0
        %2340 = vmatpush1.bf16.msra.mxu0 0
        %2341 = vmatprep.subr.bf16.mxu0 0
        %2342 = vmatpush1.bf16.msra.mxu0 0
        %2343 = vmatprep.subr.bf16.mxu0 0
        %2344 = vmatpush1.bf16.msra.mxu0 0
        %2345 = vmatprep.subr.bf16.mxu0 0
        %2346 = vmatpush1.bf16.msra.mxu0 0
        %2347 = vmatprep.subr.bf16.mxu0 0
        %2348 = vmatpush1.bf16.msra.mxu0 0
        %2349 = vmatprep.subr.bf16.mxu0 0
        %2350 = vmatpush1.bf16.msra.mxu0 0
        %2351 = vmatprep.subr.bf16.mxu0 0
        %2352 = vmatpush1.bf16.msra.mxu0 0
        %2353 = vmatprep.subr.bf16.mxu0 0
        %2354 = vmatpush1.bf16.msra.mxu0 0
        %2355 = vmatprep.subr.bf16.mxu0 0
        %2356 = vmatpush1.bf16.msra.mxu0 0
        %2357 = vmatprep.mubr.bf16.mxu0 0
        %2358 = vmatmul.mubr.bf16.gmra.mrb[0].mxu0 %v1562
        %v2359 = vpop.f32.mrb[0].mxu0
        %v2360 = vadd.f32 %v2023, %v2359
        %v2361 = vpop.f32.mrb[0].mxu0
        %v2362 = vpop.f32.mrb[0].mxu0
        %v2363 = vadd.f32 %v2024, %v2362
        %v2364 = vpop.f32.mrb[0].mxu0
        %2365 = vmatprep.mubr.bf16.mxu0 0
        %2366 = vmatmul.mubr.bf16.gmra.mrb[0].mxu0 %v1565
        %v2367 = vpop.f32.mrb[0].mxu0
        %v2368 = vadd.f32 %v2025, %v2367
        %v2369 = vpop.f32.mrb[0].mxu0
        %v2370 = vpop.f32.mrb[0].mxu0
        %v2371 = vadd.f32 %v2026, %v2370
        %v2372 = vpop.f32.mrb[0].mxu0
        %2373 = vdwg.mxu0
        %2374 = vmatprep.subr.bf16.mxu0 0
        %2375 = vmatpush1.bf16.msra.mxu0 %v1997
        %2376 = vmatprep.subr.bf16.mxu0 0
        %2377 = vmatpush1.bf16.msra.mxu0 %v1998
        %2378 = vmatprep.subr.bf16.mxu0 0
        %2379 = vmatpush1.bf16.msra.mxu0 0
        %2380 = vmatprep.subr.bf16.mxu0 0
        %2381 = vmatpush1.bf16.msra.mxu0 0
        %2382 = vmatprep.subr.bf16.mxu0 0
        %2383 = vmatpush1.bf16.msra.mxu0 0
        %2384 = vmatprep.subr.bf16.mxu0 0
        %2385 = vmatpush1.bf16.msra.mxu0 0
        %2386 = vmatprep.subr.bf16.mxu0 0
        %2387 = vmatpush1.bf16.msra.mxu0 0
        %2388 = vmatprep.subr.bf16.mxu0 0
        %2389 = vmatpush1.bf16.msra.mxu0 0
        %2390 = vmatprep.subr.bf16.mxu0 0
        %2391 = vmatpush1.bf16.msra.mxu0 0
        %2392 = vmatprep.subr.bf16.mxu0 0
        %2393 = vmatpush1.bf16.msra.mxu0 0
        %2394 = vmatprep.subr.bf16.mxu0 0
        %2395 = vmatpush1.bf16.msra.mxu0 0
        %2396 = vmatprep.subr.bf16.mxu0 0
        %2397 = vmatpush1.bf16.msra.mxu0 0
        %2398 = vmatprep.subr.bf16.mxu0 0
        %2399 = vmatpush1.bf16.msra.mxu0 0
        %2400 = vmatprep.subr.bf16.mxu0 0
        %2401 = vmatpush1.bf16.msra.mxu0 0
        %2402 = vmatprep.subr.bf16.mxu0 0
        %2403 = vmatpush1.bf16.msra.mxu0 0
        %2404 = vmatprep.subr.bf16.mxu0 0
        %2405 = vmatpush1.bf16.msra.mxu0 0
        %2406 = vmatprep.mubr.bf16.mxu0 0
        %2407 = vmatmul.mubr.bf16.gmra.mrb[0].mxu0 %v1617
        %v2408 = vpop.f32.mrb[0].mxu0
        %v2409 = vadd.f32 %v2027, %v2408
        %v2410 = vpop.f32.mrb[0].mxu0
        %v2411 = vpop.f32.mrb[0].mxu0
        %v2412 = vadd.f32 %v2028, %v2411
        %v2413 = vpop.f32.mrb[0].mxu0
        %2414 = vmatprep.mubr.bf16.mxu0 0
        %2415 = vmatmul.mubr.bf16.gmra.mrb[0].mxu0 %v1620
        %v2416 = vpop.f32.mrb[0].mxu0
        %v2417 = vadd.f32 %v2029, %v2416
        %v2418 = vpop.f32.mrb[0].mxu0
        %v2419 = vpop.f32.mrb[0].mxu0
        %v2420 = vadd.f32 %v2030, %v2419
        %v2421 = vpop.f32.mrb[0].mxu0
        %2422 = vdwg.mxu0
        %v2423 = vld [vmem:[%s6] sm:$0x1]
        %v2425 = vlaneseq
        %v2426 = vshrl.u32 %v2425, 7
        %v2427 = vsub.s32 0, %v2426
        %v2428 = vrot.slane %v2423, %v2427
        %v2430 = vadd.f32 %v2066, %v2428
        %v2431 = vadd.f32 %v2069, %v2428
        %v2432 = vadd.f32 %v2074, %v2428
        %v2433 = vadd.f32 %v2077, %v2428
        %v2434 = vadd.f32 %v2115, %v2428
        %v2435 = vadd.f32 %v2118, %v2428
        %v2436 = vadd.f32 %v2123, %v2428
        %v2437 = vadd.f32 %v2126, %v2428
        %v2438 = vadd.f32 %v2164, %v2428
        %v2439 = vadd.f32 %v2167, %v2428
        %v2440 = vadd.f32 %v2172, %v2428
        %v2441 = vadd.f32 %v2175, %v2428
        %v2442 = vadd.f32 %v2213, %v2428
        %v2443 = vadd.f32 %v2216, %v2428
        %v2444 = vadd.f32 %v2221, %v2428
        %v2445 = vadd.f32 %v2224, %v2428
        %v2446 = vadd.f32 %v2262, %v2428
        %v2447 = vadd.f32 %v2265, %v2428
        %v2448 = vadd.f32 %v2270, %v2428
        %v2449 = vadd.f32 %v2273, %v2428
        %v2450 = vadd.f32 %v2311, %v2428
        %v2451 = vadd.f32 %v2314, %v2428
        %v2452 = vadd.f32 %v2319, %v2428
        %v2453 = vadd.f32 %v2322, %v2428
        %v2454 = vadd.f32 %v2360, %v2428
        %v2455 = vadd.f32 %v2363, %v2428
        %v2456 = vadd.f32 %v2368, %v2428
        %v2457 = vadd.f32 %v2371, %v2428
        %v2458 = vadd.f32 %v2409, %v2428
        %v2459 = vadd.f32 %v2412, %v2428
        %v2460 = vadd.f32 %v2417, %v2428
        %v2461 = vadd.f32 %v2420, %v2428
        %2462 = vst [vmem:[%s379] sm:$0xff] %v2430
        %2463 = vst [vmem:[%s379 + $0x8] sm:$0xff] %v2431
        %2464 = vst [vmem:[%s379 + $0x10] sm:$0xff] %v2432
        %2465 = vst [vmem:[%s379 + $0x18] sm:$0xff] %v2433
        %2466 = vst [vmem:[%s379 + $0x20] sm:$0xff] %v2434
        %2467 = vst [vmem:[%s379 + $0x28] sm:$0xff] %v2435
        %2468 = vst [vmem:[%s379 + $0x30] sm:$0xff] %v2436
        %2469 = vst [vmem:[%s379 + $0x38] sm:$0xff] %v2437
        %2470 = vst [vmem:[%s379 + $0x40] sm:$0xff] %v2438
        %2471 = vst [vmem:[%s379 + $0x48] sm:$0xff] %v2439
        %2472 = vst [vmem:[%s379 + $0x50] sm:$0xff] %v2440
        %2473 = vst [vmem:[%s379 + $0x58] sm:$0xff] %v2441
        %2474 = vst [vmem:[%s379 + $0x60] sm:$0xff] %v2442
        %2475 = vst [vmem:[%s379 + $0x68] sm:$0xff] %v2443
        %2476 = vst [vmem:[%s379 + $0x70] sm:$0xff] %v2444
        %2477 = vst [vmem:[%s379 + $0x78] sm:$0xff] %v2445
        %2478 = vst [vmem:[%s379 + $0x80] sm:$0xff] %v2446
        %2479 = vst [vmem:[%s379 + $0x88] sm:$0xff] %v2447
        %2480 = vst [vmem:[%s379 + $0x90] sm:$0xff] %v2448
        %2481 = vst [vmem:[%s379 + $0x98] sm:$0xff] %v2449
        %2482 = vst [vmem:[%s379 + $0xa0] sm:$0xff] %v2450
        %2483 = vst [vmem:[%s379 + $0xa8] sm:$0xff] %v2451
        %2484 = vst [vmem:[%s379 + $0xb0] sm:$0xff] %v2452
        %2485 = vst [vmem:[%s379 + $0xb8] sm:$0xff] %v2453
        %2486 = vst [vmem:[%s379 + $0xc0] sm:$0xff] %v2454
        %2487 = vst [vmem:[%s379 + $0xc8] sm:$0xff] %v2455
        %2488 = vst [vmem:[%s379 + $0xd0] sm:$0xff] %v2456
        %2489 = vst [vmem:[%s379 + $0xd8] sm:$0xff] %v2457
        %2490 = vst [vmem:[%s379 + $0xe0] sm:$0xff] %v2458
        %2491 = vst [vmem:[%s379 + $0xe8] sm:$0xff] %v2459
        %2492 = vst [vmem:[%s379 + $0xf0] sm:$0xff] %v2460
        %2493 = vst [vmem:[%s379 + $0xf8] sm:$0xff] %v2461
        %s2494 = sand.u32 %s191, 1
        %s2495 = scalar_lea.sflag [#allocation4], %s2494
        %s2496 = sand.u32 %s191, 1
        %s2497 = smul.addr %s2496, 256
        %s2498 = scalar_lea.vmem [#allocation11], %s2497
        // Predicated region
        $region69: #{tpu_custom_call.1} parent=47 // pred_check
          %p2499 = pneg %p201
        $region70: #{tpu_custom_call.1} parent=47 // pred_check_branch
          %2501 = sbr.rel (%p2499) target = $region72
        $region71: #{tpu_custom_call.1} parent=47 // pred_region
          %s2502 = smul.u32 8, %s26
          %s2504 = ssub.s32 4096, 4096
          %2505 = vsyncadd %s2495, %s2504
          %s2506 = smul.addr %s2502, 4
          %s2507 = smul.addr %s2506, 128
          %s2508 = scalar_lea.hbm %s7, %s2507
          %s2509 = sshll.u32 %s2498, 4
          %s2510 = int_to_ptr.vmem [resolvable:$true] %s2509
          %2515 = dma.vmem_to_hbm [thread:$0]  %s2510, 4096, %s2508, %s2495, 128, 128, 8
        $region72: #{tpu_custom_call.1} parent=47 // pred_fallthru
          _
      $region48: #{tpu_custom_call.1} parent=5 // pred_fallthru
        _
      %p2516 = scmp.le.s32.totalorder 2, %s21
      // Predicated region
      $region73: #{tpu_custom_call.1} parent=5 // pred_check
        %p2517 = pneg %p2516
      $region74: #{tpu_custom_call.1} parent=5 // pred_check_branch
        %2519 = sbr.rel (%p2517) target = $region76
      $region75: #{tpu_custom_call.1} parent=5 // pred_region
        %s2520 = ssub.s32 %s21, 2
        // Predicated region
        $region77: #{tpu_custom_call.1} parent=75 // pred_check
          %p2521 = pneg %p207
        $region78: #{tpu_custom_call.1} parent=75 // pred_check_branch
          %2523 = sbr.rel (%p2521) target = $region80
        $region79: #{tpu_custom_call.1} parent=75 // pred_region
          %s2524 = sand.u32 %s192, 1
          %s2525 = scalar_lea.sflag [#allocation4], %s2524
          %s2526 = sand.u32 %s192, 1
          %s2527 = smul.addr %s2526, 256
          %s2528 = scalar_lea.vmem [#allocation11], %s2527
          %2529 = dma.done %s2525, 4096
        $region80: #{tpu_custom_call.1} parent=75 // pred_fallthru
          _
      $region76: #{tpu_custom_call.1} parent=5 // pred_fallthru
        _
    $region6: #{tpu_custom_call.1} parent=1 // loop_footer
      %s25 = sadd.s32 1, %s21
    $region7: #{tpu_custom_call.1} parent=1 // loop_footer_branch
      %20 = sbr.rel target = $region3
    $region8: #{tpu_custom_call.1} parent=1 // loop_exit
      _
    %2530 = vsyncpa [#allocation3], 1
    %s2531 = scalar_lea.sflag [#allocation3], 1
    %2532 = vsyncpa %s2531, 1
    %2533 = vsyncpa [#allocation6], 1
    %s2534 = scalar_lea.sflag [#allocation6], 1
    %2535 = vsyncpa %s2534, 1
    %2536 = vsyncpa [#allocation9], 1
    %2537 = vsyncpa [#allocation4], 1
    %s2538 = scalar_lea.sflag [#allocation4], 1
    %2539 = vsyncpa %s2538, 1

</llo_original>
